<compile_context>
chip_gen: v5e
topology: v5e:2x2
jax: 0.10.0
libtpu: 0.0.40
codegen_flags: <defaults>
</compile_context>

<pallas_src>
import jax
import jax.numpy as jnp
from jax.experimental import pallas as pl
from jax.experimental.pallas import tpu as pltpu

D_MODEL = 32
N_HEAD = 8
HEAD_DIM = D_MODEL // N_HEAD
SCALE = HEAD_DIM ** -0.5          # qk_scale = head_dim ** -0.5 (folded into Wq)
LN_EPS = 1e-5                     # nn.LayerNorm default eps


# ---------------------------------------------------------------------------
# In-kernel math helpers.
# ---------------------------------------------------------------------------
def _layernorm(x, g, b):
    mu = jnp.mean(x, axis=-1, keepdims=True)
    xc = x - mu
    var = jnp.mean(xc * xc, axis=-1, keepdims=True)
    return xc * jax.lax.rsqrt(var + LN_EPS) * g + b


def _gelu_tanh(x):
    # tanh-form GELU (EUP tanh). |err| vs exact erf-GELU ~1e-3, far inside tolerance.
    c0 = 0.7978845608028654  # sqrt(2/pi)
    return 0.5 * x * (1.0 + jnp.tanh(c0 * (x + 0.044715 * x * x * x)))


def _softmax_lastdim(s):
    s = s - jnp.max(s, axis=-1, keepdims=True)
    e = jnp.exp(s)
    return e * pl.reciprocal(jnp.sum(e, axis=-1, keepdims=True), approx=True)


def _mha(q_src, kv_src, w_qkv, w_out, b_out, fused_qkv):
    """Multi-head attention in head-batched layout.

    q_src : (N, C) f32        kv_src: (M, C) f32
    w_qkv : (3H, D, C) bf16   -- [Wq*scale | Wk | Wv] stacked along the head-batch axis
    w_out : (H, D, C)  bf16   -- per-head slices of the output projection
    b_out : (1, C) f32
    """
    H, D, C = w_out.shape
    N = q_src.shape[0]
    M = kv_src.shape[0]
    q16 = q_src.astype(jnp.bfloat16)

    if fused_qkv:
        # self-attention: single fused Q/K/V projection (head-batch = 3H).
        src = jnp.broadcast_to(q16[None], (3 * H, N, C))
        qkv = jnp.einsum("hnc,hdc->hnd", src, w_qkv,
                         preferred_element_type=jnp.float32)
        qh, kh, vh = qkv[0:H], qkv[H:2 * H], qkv[2 * H:3 * H]   # leading-dim splits (free)
    else:
        # cross-attention: Q from q_src, fused K/V from kv_src.
        kv16 = kv_src.astype(jnp.bfloat16)
        qb = jnp.broadcast_to(q16[None], (H, N, C))
        qh = jnp.einsum("hnc,hdc->hnd", qb, w_qkv[0:H],
                        preferred_element_type=jnp.float32)
        kvb = jnp.broadcast_to(kv16[None], (2 * H, M, C))
        kv = jnp.einsum("hnc,hdc->hnd", kvb, w_qkv[H:3 * H],
                        preferred_element_type=jnp.float32)
        kh, vh = kv[0:H], kv[H:2 * H]

    # (H, N, M) scores; qk scale already folded into Wq.
    s = jnp.einsum("hnd,hmd->hnm", qh.astype(jnp.bfloat16), kh.astype(jnp.bfloat16),
                   preferred_element_type=jnp.float32)
    p = _softmax_lastdim(s)
    o = jnp.einsum("hnm,hmd->hnd", p.astype(jnp.bfloat16), vh.astype(jnp.bfloat16),
                   preferred_element_type=jnp.float32)          # (H, N, D)
    # per-head output projection, accumulated over heads (no concatenate).
    oc = jnp.einsum("hnd,hdc->hnc", o.astype(jnp.bfloat16), w_out,
                    preferred_element_type=jnp.float32)         # (H, N, C)
    return jnp.sum(oc, axis=0) + b_out


# ---------------------------------------------------------------------------
# Fused decoder-layer kernel (one batch element per grid step).
# ---------------------------------------------------------------------------
def _decoder_layer_kernel(x_ref, mem_ref, wh_ref, wo_ref, w1_ref, w2_ref, b1_ref,
                          vec_ref, o_ref):
    H = N_HEAD
    x = x_ref[...]        # (N, C) f32
    mem = mem_ref[...]    # (M, C) f32
    wh = wh_ref[...]      # (6H, D, C) bf16 : [ca_q*s | ca_k | ca_v | sa_q*s | sa_k | sa_v]
    wo = wo_ref[...]      # (2H, D, C) bf16 : [ca_o heads | sa_o heads]
    vec = vec_ref[...]    # (9, C)  f32 : ln1_g, ln1_b, ln2_g, ln2_b, ln3_g, ln3_b,
                          #               ca_bo, sa_bo, mlp_b2

    # x = x + cross_attn(norm1(x), mem, mem)
    q = _layernorm(x, vec[0:1], vec[1:2])
    x = x + _mha(q, mem, wh[0:3 * H], wo[0:H], vec[6:7], fused_qkv=False)

    # x = x + self_attn(norm2(x), norm2(x), norm2(x))
    q2 = _layernorm(x, vec[2:3], vec[3:4])
    x = x + _mha(q2, q2, wh[3 * H:6 * H], wo[H:2 * H], vec[7:8], fused_qkv=True)

    # x = x + mlp(norm3(x))   (Linear -> GELU -> Linear; dropouts are identity)
    h = _layernorm(x, vec[4:5], vec[5:6]).astype(jnp.bfloat16)
    h = jnp.dot(h, w1_ref[...], preferred_element_type=jnp.float32) + b1_ref[...]
    h = _gelu_tanh(h)
    h = jnp.dot(h.astype(jnp.bfloat16), w2_ref[...],
                preferred_element_type=jnp.float32) + vec[8:9]
    o_ref[...] = x + h


# ---------------------------------------------------------------------------
# Wrapper: pack / reshape parameters once, then launch the kernel.
# ---------------------------------------------------------------------------
def prepare_params(p):
    C, H, D = D_MODEL, N_HEAD, HEAD_DIM

    def heads_in(w, scale=1.0):
        # (C_in, C_out) with out index = h*D + d  ->  (H, D, C_in)
        return (w * scale).reshape(C, H, D).transpose(1, 2, 0)

    def heads_out(w):
        # (C_in = H*D, C_out)  ->  (H, D, C_out)
        return w.reshape(H, D, C)

    w_heads = jnp.concatenate(
        [heads_in(p["ca_wq"], SCALE), heads_in(p["ca_wk"]), heads_in(p["ca_wv"]),
         heads_in(p["sa_wq"], SCALE), heads_in(p["sa_wk"]), heads_in(p["sa_wv"])],
        axis=0).astype(jnp.bfloat16)                                  # (6H, D, C)
    w_out = jnp.concatenate([heads_out(p["ca_wo"]), heads_out(p["sa_wo"])],
                            axis=0).astype(jnp.bfloat16)              # (2H, D, C)
    w_mlp1 = p["mlp_w1"].astype(jnp.bfloat16)                         # (C, 4C)
    w_mlp2 = p["mlp_w2"].astype(jnp.bfloat16)                         # (4C, C)
    b_mlp1 = p["mlp_b1"]                                              # (1, 4C) f32
    vec = jnp.concatenate(
        [p["ln1_g"], p["ln1_b"], p["ln2_g"], p["ln2_b"], p["ln3_g"], p["ln3_b"],
         p["ca_bo"], p["sa_bo"], p["mlp_b2"]], axis=0)                # (9, C) f32
    return w_heads, w_out, w_mlp1, w_mlp2, b_mlp1, vec


def transformer_decoder_layer(x, mem, params):
    B, N, C = x.shape
    _, M, _ = mem.shape
    packed = prepare_params(params)

    def per_batch(shape):
        return pl.BlockSpec((None,) + shape,
                            lambda b, n=len(shape): (b,) + (0,) * n)

    def resident(arr):
        # Constant index map: buffer is DMA'd for step 0 and stays resident afterwards.
        return pl.BlockSpec(arr.shape, lambda b, n=arr.ndim: (0,) * n)

    return pl.pallas_call(
        _decoder_layer_kernel,
        out_shape=jax.ShapeDtypeStruct((B, N, C), jnp.float32),
        grid=(B,),
        in_specs=[per_batch((N, C)), per_batch((M, C))] + [resident(a) for a in packed],
        out_specs=per_batch((N, C)),
        compiler_params=pltpu.CompilerParams(dimension_semantics=("parallel",)),
    )(x, mem, *packed)


# ---------------------------------------------------------------------------
# Deterministic synthetic parameters (shapes from TransformerDecoderLayer.__init__).
# Weights are stored transposed to (in, out) so y = x @ W + b.
# ---------------------------------------------------------------------------
def init_params(key, d_model=D_MODEL):
    ks = jax.random.split(key, 14)
    d4 = d_model * 4

    def w(k, i, o):
        return jax.random.normal(k, (i, o), jnp.float32) * (i ** -0.5)

    def b(k, o):
        return jax.random.normal(k, (1, o), jnp.float32) * 0.05

    return {
        "ln1_g": jnp.ones((1, d_model), jnp.float32),
        "ln1_b": jnp.zeros((1, d_model), jnp.float32),
        "ln2_g": jnp.ones((1, d_model), jnp.float32),
        "ln2_b": jnp.zeros((1, d_model), jnp.float32),
        "ln3_g": jnp.ones((1, d_model), jnp.float32),
        "ln3_b": jnp.zeros((1, d_model), jnp.float32),
        "ca_wq": w(ks[0], d_model, d_model),
        "ca_wk": w(ks[1], d_model, d_model),
        "ca_wv": w(ks[2], d_model, d_model),
        "ca_wo": w(ks[3], d_model, d_model),
        "ca_bo": b(ks[4], d_model),
        "sa_wq": w(ks[5], d_model, d_model),
        "sa_wk": w(ks[6], d_model, d_model),
        "sa_wv": w(ks[7], d_model, d_model),
        "sa_wo": w(ks[8], d_model, d_model),
        "sa_bo": b(ks[9], d_model),
        "mlp_w1": w(ks[10], d_model, d4),
        "mlp_b1": b(ks[11], d4),
        "mlp_w2": w(ks[12], d4, d_model),
        "mlp_b2": b(ks[13], d_model),
    }


# ---------------------------------------------------------------------------
# Pure-JAX f32 reference (mirrors the PyTorch forward in eval mode).
# ---------------------------------------------------------------------------
def ref_decoder_layer(x, mem, p):
    def ln(t, g, b):
        mu = jnp.mean(t, axis=-1, keepdims=True)
        var = jnp.mean(jnp.square(t - mu), axis=-1, keepdims=True)
        return (t - mu) / jnp.sqrt(var + LN_EPS) * g + b

    def attn(q, kv, wq, wk, wv, wo, bo):
        B, N, C = q.shape
        M = kv.shape[1]
        qp = (q @ wq).reshape(B, N, N_HEAD, HEAD_DIM)
        kp = (kv @ wk).reshape(B, M, N_HEAD, HEAD_DIM)
        vp = (kv @ wv).reshape(B, M, N_HEAD, HEAD_DIM)
        a = jnp.einsum("bnhd,bmhd->bhnm", qp, kp) * SCALE
        a = jax.nn.softmax(a, axis=-1)
        o = jnp.einsum("bhnm,bmhd->bnhd", a, vp).reshape(B, N, C)
        return o @ wo + bo

    q = ln(x, p["ln1_g"], p["ln1_b"])
    x = x + attn(q, mem, p["ca_wq"], p["ca_wk"], p["ca_wv"], p["ca_wo"], p["ca_bo"])
    q2 = ln(x, p["ln2_g"], p["ln2_b"])
    x = x + attn(q2, q2, p["sa_wq"], p["sa_wk"], p["sa_wv"], p["sa_wo"], p["sa_bo"])
    h = ln(x, p["ln3_g"], p["ln3_b"])
    h = jax.nn.gelu(h @ p["mlp_w1"] + p["mlp_b1"], approximate=False)
    h = h @ p["mlp_w2"] + p["mlp_b2"]
    return x + h


if __name__ == "__main__":
    key = jax.random.PRNGKey(0)
    kx, kmem, kp = jax.random.split(key, 3)

    B, N, M = 2, 8, 16          # batch, target seq, memory seq
    x = jax.random.normal(kx, (B, N, D_MODEL), jnp.float32)
    mem = jax.random.normal(kmem, (B, M, D_MODEL), jnp.float32)
    params = init_params(kp)

    out = jax.block_until_ready(transformer_decoder_layer(x, mem, params))
    ref = jax.block_until_ready(ref_decoder_layer(x, mem, params))

    assert out.shape == (B, N, D_MODEL)
    # scaled tolerance accounts for intentional bf16 matmul operands + tanh GELU
    err = float(jnp.max(jnp.abs(out - ref) / (1.0 + jnp.abs(ref))))
    assert err < 4e-2, f"max scaled err too large: {err}"

    print("KERNEL_OK")
</pallas_src>

<mosaic_0001>
module attributes {stable_mosaic.version = 11 : i64} {
  func.func @_decoder_layer_kernel(%arg0: i32, %arg1: memref<1x8x32xf32, #tpu.memory_space<vmem>>, %arg2: memref<1x16x32xf32, #tpu.memory_space<vmem>>, %arg3: memref<48x4x32xbf16, #tpu.memory_space<vmem>>, %arg4: memref<16x4x32xbf16, #tpu.memory_space<vmem>>, %arg5: memref<32x128xbf16, #tpu.memory_space<vmem>>, %arg6: memref<128x32xbf16, #tpu.memory_space<vmem>>, %arg7: memref<1x128xf32, #tpu.memory_space<vmem>>, %arg8: memref<9x32xf32, #tpu.memory_space<vmem>>, %arg9: memref<1x8x32xf32, #tpu.memory_space<vmem>>) attributes {dimension_semantics = [#tpu.dimension_semantics<parallel>], iteration_bounds = array<i64: 2>, scalar_prefetch = 0 : i64, scratch_operands = 0 : i64, tpu.core_type = #tpu.core_type<tc>, window_params = [{transform_indices = @transform_0, window_bounds = array<i64: 1, 8, 32>}, {transform_indices = @transform_1, window_bounds = array<i64: 1, 16, 32>}, {pipeline_mode = #tpu.pipeline_mode<synchronous>, transform_indices = @transform_2, window_bounds = array<i64: 48, 4, 32>}, {pipeline_mode = #tpu.pipeline_mode<synchronous>, transform_indices = @transform_3, window_bounds = array<i64: 16, 4, 32>}, {pipeline_mode = #tpu.pipeline_mode<synchronous>, transform_indices = @transform_4, window_bounds = array<i64: 32, 128>}, {pipeline_mode = #tpu.pipeline_mode<synchronous>, transform_indices = @transform_5, window_bounds = array<i64: 128, 32>}, {pipeline_mode = #tpu.pipeline_mode<synchronous>, transform_indices = @transform_6, window_bounds = array<i64: 1, 128>}, {pipeline_mode = #tpu.pipeline_mode<synchronous>, transform_indices = @transform_7, window_bounds = array<i64: 9, 32>}, {transform_indices = @transform_8, window_bounds = array<i64: 1, 8, 32>}]} {
    %c0 = arith.constant 0 : index
    %c0_0 = arith.constant 0 : index
    %c0_1 = arith.constant 0 : index
    %0 = vector.load %arg1[%c0, %c0_0, %c0_1] : memref<1x8x32xf32, #tpu.memory_space<vmem>>, vector<1x8x32xf32>
    %1 = vector.shape_cast %0 : vector<1x8x32xf32> to vector<8x32xf32>
    %c0_2 = arith.constant 0 : index
    %c0_3 = arith.constant 0 : index
    %c0_4 = arith.constant 0 : index
    %2 = vector.load %arg2[%c0_2, %c0_3, %c0_4] : memref<1x16x32xf32, #tpu.memory_space<vmem>>, vector<1x16x32xf32>
    %3 = vector.shape_cast %2 : vector<1x16x32xf32> to vector<16x32xf32>
    %c0_5 = arith.constant 0 : index
    %c0_6 = arith.constant 0 : index
    %c0_7 = arith.constant 0 : index
    %4 = vector.load %arg3[%c0_5, %c0_6, %c0_7] : memref<48x4x32xbf16, #tpu.memory_space<vmem>>, vector<48x4x32xbf16>
    %c0_8 = arith.constant 0 : index
    %c0_9 = arith.constant 0 : index
    %c0_10 = arith.constant 0 : index
    %5 = vector.load %arg4[%c0_8, %c0_9, %c0_10] : memref<16x4x32xbf16, #tpu.memory_space<vmem>>, vector<16x4x32xbf16>
    %c0_11 = arith.constant 0 : index
    %c0_12 = arith.constant 0 : index
    %6 = vector.load %arg8[%c0_11, %c0_12] : memref<9x32xf32, #tpu.memory_space<vmem>>, vector<9x32xf32>
    %7 = vector.extract_strided_slice %6 {offsets = [0, 0], sizes = [1, 32], strides = [1, 1]} : vector<9x32xf32> to vector<1x32xf32>
    %8 = vector.extract_strided_slice %6 {offsets = [1, 0], sizes = [1, 32], strides = [1, 1]} : vector<9x32xf32> to vector<1x32xf32>
    %cst = arith.constant dense<0.000000e+00> : vector<8xf32>
    %9 = vector.multi_reduction <add>, %1, %cst [1] : vector<8x32xf32> to vector<8xf32>
    %10 = vector.shape_cast %9 : vector<8xf32> to vector<8x1xf32>
    %cst_13 = arith.constant 3.200000e+01 : f32
    %11 = vector.broadcast %cst_13 : f32 to vector<8x1xf32>
    %12 = arith.divf %10, %11 : vector<8x1xf32>
    %13 = vector.broadcast %12 : vector<8x1xf32> to vector<8x32xf32>
    %14 = arith.subf %1, %13 : vector<8x32xf32>
    %15 = arith.mulf %14, %14 : vector<8x32xf32>
    %cst_14 = arith.constant dense<0.000000e+00> : vector<8xf32>
    %16 = vector.multi_reduction <add>, %15, %cst_14 [1] : vector<8x32xf32> to vector<8xf32>
    %17 = vector.shape_cast %16 : vector<8xf32> to vector<8x1xf32>
    %cst_15 = arith.constant 3.200000e+01 : f32
    %18 = vector.broadcast %cst_15 : f32 to vector<8x1xf32>
    %19 = arith.divf %17, %18 : vector<8x1xf32>
    %cst_16 = arith.constant 9.99999974E-6 : f32
    %20 = vector.broadcast %cst_16 : f32 to vector<8x1xf32>
    %21 = arith.addf %19, %20 : vector<8x1xf32>
    %22 = math.rsqrt %21 : vector<8x1xf32>
    %23 = vector.broadcast %22 : vector<8x1xf32> to vector<8x32xf32>
    %24 = arith.mulf %14, %23 : vector<8x32xf32>
    %25 = vector.broadcast %7 : vector<1x32xf32> to vector<8x32xf32>
    %26 = arith.mulf %24, %25 : vector<8x32xf32>
    %27 = vector.broadcast %8 : vector<1x32xf32> to vector<8x32xf32>
    %28 = arith.addf %26, %27 : vector<8x32xf32>
    %29 = vector.extract_strided_slice %4 {offsets = [0, 0, 0], sizes = [24, 4, 32], strides = [1, 1, 1]} : vector<48x4x32xbf16> to vector<24x4x32xbf16>
    %30 = vector.extract_strided_slice %5 {offsets = [0, 0, 0], sizes = [8, 4, 32], strides = [1, 1, 1]} : vector<16x4x32xbf16> to vector<8x4x32xbf16>
    %31 = vector.extract_strided_slice %6 {offsets = [6, 0], sizes = [1, 32], strides = [1, 1]} : vector<9x32xf32> to vector<1x32xf32>
    %32 = arith.truncf %28 : vector<8x32xf32> to vector<8x32xbf16>
    %33 = arith.truncf %3 : vector<16x32xf32> to vector<16x32xbf16>
    %34 = vector.shape_cast %32 : vector<8x32xbf16> to vector<1x8x32xbf16>
    %35 = vector.shape_cast %34 : vector<1x8x32xbf16> to vector<1x8x32xbf16>
    %36 = vector.broadcast %35 : vector<1x8x32xbf16> to vector<8x8x32xbf16>
    %37 = vector.extract_strided_slice %29 {offsets = [0, 0, 0], sizes = [8, 4, 32], strides = [1, 1, 1]} : vector<24x4x32xbf16> to vector<8x4x32xbf16>
    "tpu.trace_start"() <{level = 10 : i32, message = "hnc,hdc->hnd"}> : () -> ()
    %cst_17 = arith.constant dense<0.000000e+00> : vector<8x8x4xf32>
    %38 = tpu.matmul %36, %37, %cst_17 {dimension_numbers = #tpu.dot_dimension_numbers<[2], [2], [1], [1], [0, 0, 0, 1, 1, 1], [0], [0]>} : vector<8x8x32xbf16>, vector<8x4x32xbf16>, vector<8x8x4xf32> -> vector<8x8x4xf32>
    "tpu.trace_stop"() : () -> ()
    %39 = vector.shape_cast %33 : vector<16x32xbf16> to vector<1x16x32xbf16>
    %40 = vector.shape_cast %39 : vector<1x16x32xbf16> to vector<1x16x32xbf16>
    %41 = vector.broadcast %40 : vector<1x16x32xbf16> to vector<16x16x32xbf16>
    %42 = vector.extract_strided_slice %29 {offsets = [8, 0, 0], sizes = [16, 4, 32], strides = [1, 1, 1]} : vector<24x4x32xbf16> to vector<16x4x32xbf16>
    "tpu.trace_start"() <{level = 10 : i32, message = "hnc,hdc->hnd"}> : () -> ()
    %cst_18 = arith.constant dense<0.000000e+00> : vector<16x16x4xf32>
    %43 = tpu.matmul %41, %42, %cst_18 {dimension_numbers = #tpu.dot_dimension_numbers<[2], [2], [1], [1], [0, 0, 0, 1, 1, 1], [0], [0]>} : vector<16x16x32xbf16>, vector<16x4x32xbf16>, vector<16x16x4xf32> -> vector<16x16x4xf32>
    "tpu.trace_stop"() : () -> ()
    %44 = vector.extract_strided_slice %43 {offsets = [0, 0, 0], sizes = [8, 16, 4], strides = [1, 1, 1]} : vector<16x16x4xf32> to vector<8x16x4xf32>
    %45 = vector.extract_strided_slice %43 {offsets = [8, 0, 0], sizes = [8, 16, 4], strides = [1, 1, 1]} : vector<16x16x4xf32> to vector<8x16x4xf32>
    %46 = arith.truncf %38 : vector<8x8x4xf32> to vector<8x8x4xbf16>
    %47 = arith.truncf %44 : vector<8x16x4xf32> to vector<8x16x4xbf16>
    "tpu.trace_start"() <{level = 10 : i32, message = "hnd,hmd->hnm"}> : () -> ()
    %cst_19 = arith.constant dense<0.000000e+00> : vector<8x8x16xf32>
    %48 = tpu.matmul %46, %47, %cst_19 {dimension_numbers = #tpu.dot_dimension_numbers<[2], [2], [1], [1], [0, 0, 0, 1, 1, 1], [0], [0]>} : vector<8x8x4xbf16>, vector<8x16x4xbf16>, vector<8x8x16xf32> -> vector<8x8x16xf32>
    "tpu.trace_stop"() : () -> ()
    %cst_20 = arith.constant dense<0xFF800000> : vector<8x8xf32>
    %49 = vector.multi_reduction <maximumf>, %48, %cst_20 [2] : vector<8x8x16xf32> to vector<8x8xf32>
    %50 = vector.shape_cast %49 : vector<8x8xf32> to vector<8x8x1xf32>
    %51 = vector.broadcast %50 : vector<8x8x1xf32> to vector<8x8x16xf32>
    %52 = arith.subf %48, %51 : vector<8x8x16xf32>
    %53 = math.exp %52 : vector<8x8x16xf32>
    %cst_21 = arith.constant dense<0.000000e+00> : vector<8x8xf32>
    %54 = vector.multi_reduction <add>, %53, %cst_21 [2] : vector<8x8x16xf32> to vector<8x8xf32>
    %55 = vector.shape_cast %54 : vector<8x8xf32> to vector<8x8x1xf32>
    %56 = tpu.reciprocal %55 {approx = true} : vector<8x8x1xf32> -> vector<8x8x1xf32>
    %57 = vector.broadcast %56 : vector<8x8x1xf32> to vector<8x8x16xf32>
    %58 = arith.mulf %53, %57 : vector<8x8x16xf32>
    %59 = arith.truncf %58 : vector<8x8x16xf32> to vector<8x8x16xbf16>
    %60 = arith.truncf %45 : vector<8x16x4xf32> to vector<8x16x4xbf16>
    "tpu.trace_start"() <{level = 10 : i32, message = "hnm,hmd->hnd"}> : () -> ()
    %cst_22 = arith.constant dense<0.000000e+00> : vector<8x8x4xf32>
    %61 = tpu.matmul %59, %60, %cst_22 {dimension_numbers = #tpu.dot_dimension_numbers<[2], [1], [1], [2], [0, 0, 0, 1, 1, 2], [0], [0]>} : vector<8x8x16xbf16>, vector<8x16x4xbf16>, vector<8x8x4xf32> -> vector<8x8x4xf32>
    "tpu.trace_stop"() : () -> ()
    %62 = arith.truncf %61 : vector<8x8x4xf32> to vector<8x8x4xbf16>
    "tpu.trace_start"() <{level = 10 : i32, message = "hnd,hdc->hnc"}> : () -> ()
    %cst_23 = arith.constant dense<0.000000e+00> : vector<8x8x32xf32>
    %63 = tpu.matmul %62, %30, %cst_23 {dimension_numbers = #tpu.dot_dimension_numbers<[2], [1], [1], [2], [0, 0, 0, 1, 1, 2], [0], [0]>} : vector<8x8x4xbf16>, vector<8x4x32xbf16>, vector<8x8x32xf32> -> vector<8x8x32xf32>
    "tpu.trace_stop"() : () -> ()
    %cst_24 = arith.constant dense<0.000000e+00> : vector<8x32xf32>
    %64 = vector.multi_reduction <add>, %63, %cst_24 [0] : vector<8x8x32xf32> to vector<8x32xf32>
    %65 = vector.broadcast %31 : vector<1x32xf32> to vector<8x32xf32>
    %66 = arith.addf %64, %65 : vector<8x32xf32>
    %67 = arith.addf %1, %66 : vector<8x32xf32>
    %68 = vector.extract_strided_slice %6 {offsets = [2, 0], sizes = [1, 32], strides = [1, 1]} : vector<9x32xf32> to vector<1x32xf32>
    %69 = vector.extract_strided_slice %6 {offsets = [3, 0], sizes = [1, 32], strides = [1, 1]} : vector<9x32xf32> to vector<1x32xf32>
    %cst_25 = arith.constant dense<0.000000e+00> : vector<8xf32>
    %70 = vector.multi_reduction <add>, %67, %cst_25 [1] : vector<8x32xf32> to vector<8xf32>
    %71 = vector.shape_cast %70 : vector<8xf32> to vector<8x1xf32>
    %cst_26 = arith.constant 3.200000e+01 : f32
    %72 = vector.broadcast %cst_26 : f32 to vector<8x1xf32>
    %73 = arith.divf %71, %72 : vector<8x1xf32>
    %74 = vector.broadcast %73 : vector<8x1xf32> to vector<8x32xf32>
    %75 = arith.subf %67, %74 : vector<8x32xf32>
    %76 = arith.mulf %75, %75 : vector<8x32xf32>
    %cst_27 = arith.constant dense<0.000000e+00> : vector<8xf32>
    %77 = vector.multi_reduction <add>, %76, %cst_27 [1] : vector<8x32xf32> to vector<8xf32>
    %78 = vector.shape_cast %77 : vector<8xf32> to vector<8x1xf32>
    %cst_28 = arith.constant 3.200000e+01 : f32
    %79 = vector.broadcast %cst_28 : f32 to vector<8x1xf32>
    %80 = arith.divf %78, %79 : vector<8x1xf32>
    %cst_29 = arith.constant 9.99999974E-6 : f32
    %81 = vector.broadcast %cst_29 : f32 to vector<8x1xf32>
    %82 = arith.addf %80, %81 : vector<8x1xf32>
    %83 = math.rsqrt %82 : vector<8x1xf32>
    %84 = vector.broadcast %83 : vector<8x1xf32> to vector<8x32xf32>
    %85 = arith.mulf %75, %84 : vector<8x32xf32>
    %86 = vector.broadcast %68 : vector<1x32xf32> to vector<8x32xf32>
    %87 = arith.mulf %85, %86 : vector<8x32xf32>
    %88 = vector.broadcast %69 : vector<1x32xf32> to vector<8x32xf32>
    %89 = arith.addf %87, %88 : vector<8x32xf32>
    %90 = vector.extract_strided_slice %4 {offsets = [24, 0, 0], sizes = [24, 4, 32], strides = [1, 1, 1]} : vector<48x4x32xbf16> to vector<24x4x32xbf16>
    %91 = vector.extract_strided_slice %5 {offsets = [8, 0, 0], sizes = [8, 4, 32], strides = [1, 1, 1]} : vector<16x4x32xbf16> to vector<8x4x32xbf16>
    %92 = vector.extract_strided_slice %6 {offsets = [7, 0], sizes = [1, 32], strides = [1, 1]} : vector<9x32xf32> to vector<1x32xf32>
    %93 = arith.truncf %89 : vector<8x32xf32> to vector<8x32xbf16>
    %94 = vector.shape_cast %93 : vector<8x32xbf16> to vector<1x8x32xbf16>
    %95 = vector.shape_cast %94 : vector<1x8x32xbf16> to vector<1x8x32xbf16>
    %96 = vector.broadcast %95 : vector<1x8x32xbf16> to vector<24x8x32xbf16>
    "tpu.trace_start"() <{level = 10 : i32, message = "hnc,hdc->hnd"}> : () -> ()
    %cst_30 = arith.constant dense<0.000000e+00> : vector<24x8x4xf32>
    %97 = tpu.matmul %96, %90, %cst_30 {dimension_numbers = #tpu.dot_dimension_numbers<[2], [2], [1], [1], [0, 0, 0, 1, 1, 1], [0], [0]>} : vector<24x8x32xbf16>, vector<24x4x32xbf16>, vector<24x8x4xf32> -> vector<24x8x4xf32>
    "tpu.trace_stop"() : () -> ()
    %98 = vector.extract_strided_slice %97 {offsets = [0, 0, 0], sizes = [8, 8, 4], strides = [1, 1, 1]} : vector<24x8x4xf32> to vector<8x8x4xf32>
    %99 = vector.extract_strided_slice %97 {offsets = [8, 0, 0], sizes = [8, 8, 4], strides = [1, 1, 1]} : vector<24x8x4xf32> to vector<8x8x4xf32>
    %100 = vector.extract_strided_slice %97 {offsets = [16, 0, 0], sizes = [8, 8, 4], strides = [1, 1, 1]} : vector<24x8x4xf32> to vector<8x8x4xf32>
    %101 = arith.truncf %98 : vector<8x8x4xf32> to vector<8x8x4xbf16>
    %102 = arith.truncf %99 : vector<8x8x4xf32> to vector<8x8x4xbf16>
    "tpu.trace_start"() <{level = 10 : i32, message = "hnd,hmd->hnm"}> : () -> ()
    %cst_31 = arith.constant dense<0.000000e+00> : vector<8x8x8xf32>
    %103 = tpu.matmul %101, %102, %cst_31 {dimension_numbers = #tpu.dot_dimension_numbers<[2], [2], [1], [1], [0, 0, 0, 1, 1, 1], [0], [0]>} : vector<8x8x4xbf16>, vector<8x8x4xbf16>, vector<8x8x8xf32> -> vector<8x8x8xf32>
    "tpu.trace_stop"() : () -> ()
    %cst_32 = arith.constant dense<0xFF800000> : vector<8x8xf32>
    %104 = vector.multi_reduction <maximumf>, %103, %cst_32 [2] : vector<8x8x8xf32> to vector<8x8xf32>
    %105 = vector.shape_cast %104 : vector<8x8xf32> to vector<8x8x1xf32>
    %106 = vector.broadcast %105 : vector<8x8x1xf32> to vector<8x8x8xf32>
    %107 = arith.subf %103, %106 : vector<8x8x8xf32>
    %108 = math.exp %107 : vector<8x8x8xf32>
    %cst_33 = arith.constant dense<0.000000e+00> : vector<8x8xf32>
    %109 = vector.multi_reduction <add>, %108, %cst_33 [2] : vector<8x8x8xf32> to vector<8x8xf32>
    %110 = vector.shape_cast %109 : vector<8x8xf32> to vector<8x8x1xf32>
    %111 = tpu.reciprocal %110 {approx = true} : vector<8x8x1xf32> -> vector<8x8x1xf32>
    %112 = vector.broadcast %111 : vector<8x8x1xf32> to vector<8x8x8xf32>
    %113 = arith.mulf %108, %112 : vector<8x8x8xf32>
    %114 = arith.truncf %113 : vector<8x8x8xf32> to vector<8x8x8xbf16>
    %115 = arith.truncf %100 : vector<8x8x4xf32> to vector<8x8x4xbf16>
    "tpu.trace_start"() <{level = 10 : i32, message = "hnm,hmd->hnd"}> : () -> ()
    %cst_34 = arith.constant dense<0.000000e+00> : vector<8x8x4xf32>
    %116 = tpu.matmul %114, %115, %cst_34 {dimension_numbers = #tpu.dot_dimension_numbers<[2], [1], [1], [2], [0, 0, 0, 1, 1, 2], [0], [0]>} : vector<8x8x8xbf16>, vector<8x8x4xbf16>, vector<8x8x4xf32> -> vector<8x8x4xf32>
    "tpu.trace_stop"() : () -> ()
    %117 = arith.truncf %116 : vector<8x8x4xf32> to vector<8x8x4xbf16>
    "tpu.trace_start"() <{level = 10 : i32, message = "hnd,hdc->hnc"}> : () -> ()
    %cst_35 = arith.constant dense<0.000000e+00> : vector<8x8x32xf32>
    %118 = tpu.matmul %117, %91, %cst_35 {dimension_numbers = #tpu.dot_dimension_numbers<[2], [1], [1], [2], [0, 0, 0, 1, 1, 2], [0], [0]>} : vector<8x8x4xbf16>, vector<8x4x32xbf16>, vector<8x8x32xf32> -> vector<8x8x32xf32>
    "tpu.trace_stop"() : () -> ()
    %cst_36 = arith.constant dense<0.000000e+00> : vector<8x32xf32>
    %119 = vector.multi_reduction <add>, %118, %cst_36 [0] : vector<8x8x32xf32> to vector<8x32xf32>
    %120 = vector.broadcast %92 : vector<1x32xf32> to vector<8x32xf32>
    %121 = arith.addf %119, %120 : vector<8x32xf32>
    %122 = arith.addf %67, %121 : vector<8x32xf32>
    %123 = vector.extract_strided_slice %6 {offsets = [4, 0], sizes = [1, 32], strides = [1, 1]} : vector<9x32xf32> to vector<1x32xf32>
    %124 = vector.extract_strided_slice %6 {offsets = [5, 0], sizes = [1, 32], strides = [1, 1]} : vector<9x32xf32> to vector<1x32xf32>
    %cst_37 = arith.constant dense<0.000000e+00> : vector<8xf32>
    %125 = vector.multi_reduction <add>, %122, %cst_37 [1] : vector<8x32xf32> to vector<8xf32>
    %126 = vector.shape_cast %125 : vector<8xf32> to vector<8x1xf32>
    %cst_38 = arith.constant 3.200000e+01 : f32
    %127 = vector.broadcast %cst_38 : f32 to vector<8x1xf32>
    %128 = arith.divf %126, %127 : vector<8x1xf32>
    %129 = vector.broadcast %128 : vector<8x1xf32> to vector<8x32xf32>
    %130 = arith.subf %122, %129 : vector<8x32xf32>
    %131 = arith.mulf %130, %130 : vector<8x32xf32>
    %cst_39 = arith.constant dense<0.000000e+00> : vector<8xf32>
    %132 = vector.multi_reduction <add>, %131, %cst_39 [1] : vector<8x32xf32> to vector<8xf32>
    %133 = vector.shape_cast %132 : vector<8xf32> to vector<8x1xf32>
    %cst_40 = arith.constant 3.200000e+01 : f32
    %134 = vector.broadcast %cst_40 : f32 to vector<8x1xf32>
    %135 = arith.divf %133, %134 : vector<8x1xf32>
    %cst_41 = arith.constant 9.99999974E-6 : f32
    %136 = vector.broadcast %cst_41 : f32 to vector<8x1xf32>
    %137 = arith.addf %135, %136 : vector<8x1xf32>
    %138 = math.rsqrt %137 : vector<8x1xf32>
    %139 = vector.broadcast %138 : vector<8x1xf32> to vector<8x32xf32>
    %140 = arith.mulf %130, %139 : vector<8x32xf32>
    %141 = vector.broadcast %123 : vector<1x32xf32> to vector<8x32xf32>
    %142 = arith.mulf %140, %141 : vector<8x32xf32>
    %143 = vector.broadcast %124 : vector<1x32xf32> to vector<8x32xf32>
    %144 = arith.addf %142, %143 : vector<8x32xf32>
    %145 = arith.truncf %144 : vector<8x32xf32> to vector<8x32xbf16>
    %c0_42 = arith.constant 0 : index
    %c0_43 = arith.constant 0 : index
    %146 = vector.load %arg5[%c0_42, %c0_43] : memref<32x128xbf16, #tpu.memory_space<vmem>>, vector<32x128xbf16>
    %cst_44 = arith.constant dense<0.000000e+00> : vector<8x128xf32>
    %147 = tpu.matmul %145, %146, %cst_44 {dimension_numbers = #tpu.dot_dimension_numbers<[1], [0], [0], [1], [0, 0, 1, 1], [], []>} : vector<8x32xbf16>, vector<32x128xbf16>, vector<8x128xf32> -> vector<8x128xf32>
    %c0_45 = arith.constant 0 : index
    %c0_46 = arith.constant 0 : index
    %148 = vector.load %arg7[%c0_45, %c0_46] : memref<1x128xf32, #tpu.memory_space<vmem>>, vector<1x128xf32>
    %149 = vector.broadcast %148 : vector<1x128xf32> to vector<8x128xf32>
    %150 = arith.addf %147, %149 : vector<8x128xf32>
    %cst_47 = arith.constant 5.000000e-01 : f32
    %151 = vector.broadcast %cst_47 : f32 to vector<8x128xf32>
    %152 = arith.mulf %151, %150 : vector<8x128xf32>
    %cst_48 = arith.constant 4.471500e-02 : f32
    %153 = vector.broadcast %cst_48 : f32 to vector<8x128xf32>
    %154 = arith.mulf %153, %150 : vector<8x128xf32>
    %155 = arith.mulf %154, %150 : vector<8x128xf32>
    %156 = arith.mulf %155, %150 : vector<8x128xf32>
    %157 = arith.addf %150, %156 : vector<8x128xf32>
    %cst_49 = arith.constant 0.797884583 : f32
    %158 = vector.broadcast %cst_49 : f32 to vector<8x128xf32>
    %159 = arith.mulf %158, %157 : vector<8x128xf32>
    %160 = math.tanh %159 : vector<8x128xf32>
    %cst_50 = arith.constant 1.000000e+00 : f32
    %161 = vector.broadcast %cst_50 : f32 to vector<8x128xf32>
    %162 = arith.addf %161, %160 : vector<8x128xf32>
    %163 = arith.mulf %152, %162 : vector<8x128xf32>
    %164 = arith.truncf %163 : vector<8x128xf32> to vector<8x128xbf16>
    %c0_51 = arith.constant 0 : index
    %c0_52 = arith.constant 0 : index
    %165 = vector.load %arg6[%c0_51, %c0_52] : memref<128x32xbf16, #tpu.memory_space<vmem>>, vector<128x32xbf16>
    %cst_53 = arith.constant dense<0.000000e+00> : vector<8x32xf32>
    %166 = tpu.matmul %164, %165, %cst_53 {dimension_numbers = #tpu.dot_dimension_numbers<[1], [0], [0], [1], [0, 0, 1, 1], [], []>} : vector<8x128xbf16>, vector<128x32xbf16>, vector<8x32xf32> -> vector<8x32xf32>
    %167 = vector.extract_strided_slice %6 {offsets = [8, 0], sizes = [1, 32], strides = [1, 1]} : vector<9x32xf32> to vector<1x32xf32>
    %168 = vector.broadcast %167 : vector<1x32xf32> to vector<8x32xf32>
    %169 = arith.addf %166, %168 : vector<8x32xf32>
    %170 = arith.addf %122, %169 : vector<8x32xf32>
    %c0_54 = arith.constant 0 : index
    %c0_55 = arith.constant 0 : index
    %c0_56 = arith.constant 0 : index
    %171 = vector.load %arg9[%c0_54, %c0_55, %c0_56] : memref<1x8x32xf32, #tpu.memory_space<vmem>>, vector<1x8x32xf32>
    %172 = vector.shape_cast %171 : vector<1x8x32xf32> to vector<8x32xf32>
    %173 = vector.shape_cast %170 : vector<8x32xf32> to vector<1x8x32xf32>
    tpu.vector_store %arg9[%c0_54, %c0_55, %c0_56], %173 {strides = array<i32>} : memref<1x8x32xf32, #tpu.memory_space<vmem>>, vector<1x8x32xf32>,
    return
  }
  func.func @transform_0(%arg0: i32) -> (i32, i32, i32) {
    %c0_i32 = arith.constant 0 : i32
    %c0_i32_0 = arith.constant 0 : i32
    %c0_i32_1 = arith.constant 0 : i32
    return %arg0, %c0_i32, %c0_i32_0 : i32, i32, i32
  }
  func.func @transform_1(%arg0: i32) -> (i32, i32, i32) {
    %c0_i32 = arith.constant 0 : i32
    %c0_i32_0 = arith.constant 0 : i32
    %c0_i32_1 = arith.constant 0 : i32
    return %arg0, %c0_i32, %c0_i32_0 : i32, i32, i32
  }
  func.func @transform_2(%arg0: i32) -> (i32, i32, i32) {
    %c0_i32 = arith.constant 0 : i32
    %c0_i32_0 = arith.constant 0 : i32
    %c0_i32_1 = arith.constant 0 : i32
    %c0_i32_2 = arith.constant 0 : i32
    return %c0_i32, %c0_i32_0, %c0_i32_1 : i32, i32, i32
  }
  func.func @transform_3(%arg0: i32) -> (i32, i32, i32) {
    %c0_i32 = arith.constant 0 : i32
    %c0_i32_0 = arith.constant 0 : i32
    %c0_i32_1 = arith.constant 0 : i32
    %c0_i32_2 = arith.constant 0 : i32
    return %c0_i32, %c0_i32_0, %c0_i32_1 : i32, i32, i32
  }
  func.func @transform_4(%arg0: i32) -> (i32, i32) {
    %c0_i32 = arith.constant 0 : i32
    %c0_i32_0 = arith.constant 0 : i32
    %c0_i32_1 = arith.constant 0 : i32
    return %c0_i32, %c0_i32_0 : i32, i32
  }
  func.func @transform_5(%arg0: i32) -> (i32, i32) {
    %c0_i32 = arith.constant 0 : i32
    %c0_i32_0 = arith.constant 0 : i32
    %c0_i32_1 = arith.constant 0 : i32
    return %c0_i32, %c0_i32_0 : i32, i32
  }
  func.func @transform_6(%arg0: i32) -> (i32, i32) {
    %c0_i32 = arith.constant 0 : i32
    %c0_i32_0 = arith.constant 0 : i32
    %c0_i32_1 = arith.constant 0 : i32
    return %c0_i32, %c0_i32_0 : i32, i32
  }
  func.func @transform_7(%arg0: i32) -> (i32, i32) {
    %c0_i32 = arith.constant 0 : i32
    %c0_i32_0 = arith.constant 0 : i32
    %c0_i32_1 = arith.constant 0 : i32
    return %c0_i32, %c0_i32_0 : i32, i32
  }
  func.func @transform_8(%arg0: i32) -> (i32, i32, i32) {
    %c0_i32 = arith.constant 0 : i32
    %c0_i32_0 = arith.constant 0 : i32
    %c0_i32_1 = arith.constant 0 : i32
    return %arg0, %c0_i32, %c0_i32_0 : i32, i32, i32
  }
}

</mosaic_0001>

<llo_original>
// kernel: tpu_custom_call.1
$region0: #{tpu_custom_call.1}
  #allocation0 [shape = 'u32[]', space=smem, size = 0x4, offset = 0x4, fixed_abs, tag = 'smem constant byte address 0x4 - core index']
  #allocation1 [shape = 'u32[72,128]{1,0:T(1,128)}', space=vmem, size = 0x9000, scoped, tag = 'internal scratch']
  %s0 = inlined_call_operand.vmem [shape: f32[2,8,32], index: 0, kind: input, shape index: {}]
  %s1 = inlined_call_operand.vmem [shape: f32[2,16,32], index: 1, kind: input, shape index: {}]
  %s2 = inlined_call_operand.vmem [shape: bf16[48,4,32], index: 2, kind: input, shape index: {}]
  %s3 = inlined_call_operand.vmem [shape: bf16[16,4,32], index: 3, kind: input, shape index: {}]
  %s4 = inlined_call_operand.vmem [shape: bf16[32,128], index: 4, kind: input, shape index: {}]
  %s5 = inlined_call_operand.vmem [shape: bf16[128,32], index: 5, kind: input, shape index: {}]
  %s6 = inlined_call_operand.vmem [shape: f32[1,128], index: 6, kind: input, shape index: {}]
  %s7 = inlined_call_operand.vmem [shape: f32[9,32], index: 7, kind: input, shape index: {}]
  %s8 = inlined_call_operand.hbm [shape: f32[2,8,32], index: 8, kind: output, shape index: {}]
  %s9 = sld [smem:[#allocation0]]
  $region65: #{tpu_custom_call.1} parent=0
    _
  %s11 = ssub.s32 1, %s9
  %s12 = scalar_select 0, %s11, %s9
  $region1: #{tpu_custom_call.1} parent=0
    #allocation2 [shape = 'u8[8192]{0}', space=vmem, size = 0x2000, scoped, tag = 'output window, operand 0']
    #allocation3 [shape = 's32[2]{0}', space=sflag, size = 0x8, scoped, tag = 'scoped memory for tpu_custom_call.1']
    %13 = vsyncpa [#allocation3], 0
    %s14 = scalar_lea.sflag [#allocation3], 1
    %15 = vsyncpa %s14, 0
    loop: start=0, step=1, limit=4
    $region2: #{tpu_custom_call.1} parent=1 // loop_pre_header
      _
    $region3: #{tpu_custom_call.1} parent=1 // loop_header
      %s17 = sphi 0, %s21
      %p18 = scmp.ge.s32.totalorder %s17, 4
      %s27 = sphi 0, %s29
      %s30 = sphi 0, %s27
      %s31 = sphi 0, %s30
      %s47 = sphi 0, %s31
      %s53 = sphi 0, %s55
      %s56 = sphi 0, %s53
      %s57 = sphi 0, %s56
      %s73 = sphi 0, %s57
      %s77 = sphi 0, %s77
      %s79 = sphi 0, %s77
      %s80 = sphi 0, %s79
      %s94 = sphi 0, %s80
      %s98 = sphi 0, %s98
      %s100 = sphi 0, %s98
      %s101 = sphi 0, %s100
      %s115 = sphi 0, %s101
      %s119 = sphi 0, %s119
      %s121 = sphi 0, %s119
      %s122 = sphi 0, %s121
      %s136 = sphi 0, %s122
      %s140 = sphi 0, %s140
      %s142 = sphi 0, %s140
      %s143 = sphi 0, %s142
      %s157 = sphi 0, %s143
      %s161 = sphi 0, %s161
      %s163 = sphi 0, %s161
      %s164 = sphi 0, %s163
      %s178 = sphi 0, %s164
      %s182 = sphi 0, %s182
      %s184 = sphi 0, %s182
      %s185 = sphi 0, %s184
      %s199 = sphi 0, %s185
      %s205 = sphi 0, %s207
      %s208 = sphi 0, %s205
      %s209 = sphi 0, %s208
      %s225 = sphi 0, %s209
    $region4: #{tpu_custom_call.1} parent=1 // loop_header_branch
      %20 = sbr.rel (%p18) target = $region8
    $region5: #{tpu_custom_call.1} parent=1 // loop_body
      %s22 = ssub.s32 %s17, 1
      %s23 = ssub.s32 %s17, 2
      %s24 = sadd.s32 %s17, 1
      %s25 = ssub.s32 %s17, %s24
      %p26 = scmp.eq.s32.totalorder %s25, 0
      %s28 = sadd.s32 %s27, 1
      %s29 = scalar_select %p26, %s27, %s28
      %p32 = pneg %p26
      %p33 = scmp.eq.s32.totalorder %s17, 1
      %p34 = por %p32, %p33
      %p35 = scmp.ne.s32.totalorder %s27, %s30
      %p36 = scmp.eq.s32.totalorder %s17, 0
      %p37 = por %p35, %p36
      %p38 = scmp.ne.s32.totalorder %s27, %s30
      %p39 = scmp.eq.s32.totalorder %s22, 1
      %p40 = por %p38, %p39
      %p41 = scmp.ne.s32.totalorder %s30, %s31
      %p42 = scmp.eq.s32.totalorder %s22, 0
      %p43 = por %p41, %p42
      %p44 = scmp.ne.s32.totalorder %s30, %s31
      %p45 = scmp.eq.s32.totalorder %s23, 1
      %p46 = por %p44, %p45
      %p48 = scmp.ne.s32.totalorder %s31, %s47
      %p49 = scmp.eq.s32.totalorder %s23, 0
      %p50 = por %p48, %p49
      %s51 = ssub.s32 %s17, %s24
      %p52 = scmp.eq.s32.totalorder %s51, 0
      %s54 = sadd.s32 %s53, 1
      %s55 = scalar_select %p52, %s53, %s54
      %p58 = pneg %p52
      %p59 = scmp.eq.s32.totalorder %s17, 1
      %p60 = por %p58, %p59
      %p61 = scmp.ne.s32.totalorder %s53, %s56
      %p62 = scmp.eq.s32.totalorder %s17, 0
      %p63 = por %p61, %p62
      %p64 = scmp.ne.s32.totalorder %s53, %s56
      %p65 = scmp.eq.s32.totalorder %s22, 1
      %p66 = por %p64, %p65
      %p67 = scmp.ne.s32.totalorder %s56, %s57
      %p68 = scmp.eq.s32.totalorder %s22, 0
      %p69 = por %p67, %p68
      %p70 = scmp.ne.s32.totalorder %s56, %s57
      %p71 = scmp.eq.s32.totalorder %s23, 1
      %p72 = por %p70, %p71
      %p74 = scmp.ne.s32.totalorder %s57, %s73
      %p75 = scmp.eq.s32.totalorder %s23, 0
      %p76 = por %p74, %p75
      %s78 = sadd.s32 %s77, 1
      %p81 = scmp.eq.s32.totalorder %s17, 1
      %p82 = scmp.ne.s32.totalorder %s77, %s79
      %p83 = scmp.eq.s32.totalorder %s17, 0
      %p84 = por %p82, %p83
      %p85 = scmp.ne.s32.totalorder %s77, %s79
      %p86 = scmp.eq.s32.totalorder %s22, 1
      %p87 = por %p85, %p86
      %p88 = scmp.ne.s32.totalorder %s79, %s80
      %p89 = scmp.eq.s32.totalorder %s22, 0
      %p90 = por %p88, %p89
      %p91 = scmp.ne.s32.totalorder %s79, %s80
      %p92 = scmp.eq.s32.totalorder %s23, 1
      %p93 = por %p91, %p92
      %p95 = scmp.ne.s32.totalorder %s80, %s94
      %p96 = scmp.eq.s32.totalorder %s23, 0
      %p97 = por %p95, %p96
      %s99 = sadd.s32 %s98, 1
      %p102 = scmp.eq.s32.totalorder %s17, 1
      %p103 = scmp.ne.s32.totalorder %s98, %s100
      %p104 = scmp.eq.s32.totalorder %s17, 0
      %p105 = por %p103, %p104
      %p106 = scmp.ne.s32.totalorder %s98, %s100
      %p107 = scmp.eq.s32.totalorder %s22, 1
      %p108 = por %p106, %p107
      %p109 = scmp.ne.s32.totalorder %s100, %s101
      %p110 = scmp.eq.s32.totalorder %s22, 0
      %p111 = por %p109, %p110
      %p112 = scmp.ne.s32.totalorder %s100, %s101
      %p113 = scmp.eq.s32.totalorder %s23, 1
      %p114 = por %p112, %p113
      %p116 = scmp.ne.s32.totalorder %s101, %s115
      %p117 = scmp.eq.s32.totalorder %s23, 0
      %p118 = por %p116, %p117
      %s120 = sadd.s32 %s119, 1
      %p123 = scmp.eq.s32.totalorder %s17, 1
      %p124 = scmp.ne.s32.totalorder %s119, %s121
      %p125 = scmp.eq.s32.totalorder %s17, 0
      %p126 = por %p124, %p125
      %p127 = scmp.ne.s32.totalorder %s119, %s121
      %p128 = scmp.eq.s32.totalorder %s22, 1
      %p129 = por %p127, %p128
      %p130 = scmp.ne.s32.totalorder %s121, %s122
      %p131 = scmp.eq.s32.totalorder %s22, 0
      %p132 = por %p130, %p131
      %p133 = scmp.ne.s32.totalorder %s121, %s122
      %p134 = scmp.eq.s32.totalorder %s23, 1
      %p135 = por %p133, %p134
      %p137 = scmp.ne.s32.totalorder %s122, %s136
      %p138 = scmp.eq.s32.totalorder %s23, 0
      %p139 = por %p137, %p138
      %s141 = sadd.s32 %s140, 1
      %p144 = scmp.eq.s32.totalorder %s17, 1
      %p145 = scmp.ne.s32.totalorder %s140, %s142
      %p146 = scmp.eq.s32.totalorder %s17, 0
      %p147 = por %p145, %p146
      %p148 = scmp.ne.s32.totalorder %s140, %s142
      %p149 = scmp.eq.s32.totalorder %s22, 1
      %p150 = por %p148, %p149
      %p151 = scmp.ne.s32.totalorder %s142, %s143
      %p152 = scmp.eq.s32.totalorder %s22, 0
      %p153 = por %p151, %p152
      %p154 = scmp.ne.s32.totalorder %s142, %s143
      %p155 = scmp.eq.s32.totalorder %s23, 1
      %p156 = por %p154, %p155
      %p158 = scmp.ne.s32.totalorder %s143, %s157
      %p159 = scmp.eq.s32.totalorder %s23, 0
      %p160 = por %p158, %p159
      %s162 = sadd.s32 %s161, 1
      %p165 = scmp.eq.s32.totalorder %s17, 1
      %p166 = scmp.ne.s32.totalorder %s161, %s163
      %p167 = scmp.eq.s32.totalorder %s17, 0
      %p168 = por %p166, %p167
      %p169 = scmp.ne.s32.totalorder %s161, %s163
      %p170 = scmp.eq.s32.totalorder %s22, 1
      %p171 = por %p169, %p170
      %p172 = scmp.ne.s32.totalorder %s163, %s164
      %p173 = scmp.eq.s32.totalorder %s22, 0
      %p174 = por %p172, %p173
      %p175 = scmp.ne.s32.totalorder %s163, %s164
      %p176 = scmp.eq.s32.totalorder %s23, 1
      %p177 = por %p175, %p176
      %p179 = scmp.ne.s32.totalorder %s164, %s178
      %p180 = scmp.eq.s32.totalorder %s23, 0
      %p181 = por %p179, %p180
      %s183 = sadd.s32 %s182, 1
      %p186 = scmp.eq.s32.totalorder %s17, 1
      %p187 = scmp.ne.s32.totalorder %s182, %s184
      %p188 = scmp.eq.s32.totalorder %s17, 0
      %p189 = por %p187, %p188
      %p190 = scmp.ne.s32.totalorder %s182, %s184
      %p191 = scmp.eq.s32.totalorder %s22, 1
      %p192 = por %p190, %p191
      %p193 = scmp.ne.s32.totalorder %s184, %s185
      %p194 = scmp.eq.s32.totalorder %s22, 0
      %p195 = por %p193, %p194
      %p196 = scmp.ne.s32.totalorder %s184, %s185
      %p197 = scmp.eq.s32.totalorder %s23, 1
      %p198 = por %p196, %p197
      %p200 = scmp.ne.s32.totalorder %s185, %s199
      %p201 = scmp.eq.s32.totalorder %s23, 0
      %p202 = por %p200, %p201
      %s203 = ssub.s32 %s17, %s24
      %p204 = scmp.eq.s32.totalorder %s203, 0
      %s206 = sadd.s32 %s205, 1
      %s207 = scalar_select %p204, %s205, %s206
      %p210 = pneg %p204
      %p211 = scmp.eq.s32.totalorder %s17, 1
      %p212 = por %p210, %p211
      %p213 = scmp.ne.s32.totalorder %s205, %s208
      %p214 = scmp.eq.s32.totalorder %s17, 0
      %p215 = por %p213, %p214
      %p216 = scmp.ne.s32.totalorder %s205, %s208
      %p217 = scmp.eq.s32.totalorder %s22, 1
      %p218 = por %p216, %p217
      %p219 = scmp.ne.s32.totalorder %s208, %s209
      %p220 = scmp.eq.s32.totalorder %s22, 0
      %p221 = por %p219, %p220
      %p222 = scmp.ne.s32.totalorder %s208, %s209
      %p223 = scmp.eq.s32.totalorder %s23, 1
      %p224 = por %p222, %p223
      %p226 = scmp.ne.s32.totalorder %s209, %s225
      %p227 = scmp.eq.s32.totalorder %s23, 0
      %p228 = por %p226, %p227
      %p229 = scmp.le.s32.totalorder 1, %s17
      %p230 = scmp.lt.s32.totalorder %s17, 3
      %p231 = pnand %p229, %p230
      %p232 = pneg %p231
      // Predicated region
      $region9: #{tpu_custom_call.1} parent=5 // pred_check
        _
      $region10: #{tpu_custom_call.1} parent=5 // pred_check_branch
        %234 = sbr.rel (%p231) target = $region12
      $region11: #{tpu_custom_call.1} parent=5 // pred_region
        %s235 = ssub.s32 %s17, 1
        // Predicated region
        $region13: #{tpu_custom_call.1} parent=11 // pred_check
          %p236 = pneg %p90
        $region14: #{tpu_custom_call.1} parent=11 // pred_check_branch
          %238 = sbr.rel (%p236) target = $region16
        $region15: #{tpu_custom_call.1} parent=11 // pred_region
          _
        $region16: #{tpu_custom_call.1} parent=11 // pred_fallthru
          _
        // Predicated region
        $region17: #{tpu_custom_call.1} parent=11 // pred_check
          %p239 = pneg %p111
        $region18: #{tpu_custom_call.1} parent=11 // pred_check_branch
          %241 = sbr.rel (%p239) target = $region20
        $region19: #{tpu_custom_call.1} parent=11 // pred_region
          _
        $region20: #{tpu_custom_call.1} parent=11 // pred_fallthru
          _
        // Predicated region
        $region21: #{tpu_custom_call.1} parent=11 // pred_check
          %p242 = pneg %p132
        $region22: #{tpu_custom_call.1} parent=11 // pred_check_branch
          %244 = sbr.rel (%p242) target = $region24
        $region23: #{tpu_custom_call.1} parent=11 // pred_region
          _
        $region24: #{tpu_custom_call.1} parent=11 // pred_fallthru
          _
        // Predicated region
        $region25: #{tpu_custom_call.1} parent=11 // pred_check
          %p245 = pneg %p153
        $region26: #{tpu_custom_call.1} parent=11 // pred_check_branch
          %247 = sbr.rel (%p245) target = $region28
        $region27: #{tpu_custom_call.1} parent=11 // pred_region
          _
        $region28: #{tpu_custom_call.1} parent=11 // pred_fallthru
          _
        // Predicated region
        $region29: #{tpu_custom_call.1} parent=11 // pred_check
          %p248 = pneg %p174
        $region30: #{tpu_custom_call.1} parent=11 // pred_check_branch
          %250 = sbr.rel (%p248) target = $region32
        $region31: #{tpu_custom_call.1} parent=11 // pred_region
          _
        $region32: #{tpu_custom_call.1} parent=11 // pred_fallthru
          _
        // Predicated region
        $region33: #{tpu_custom_call.1} parent=11 // pred_check
          %p251 = pneg %p195
        $region34: #{tpu_custom_call.1} parent=11 // pred_check_branch
          %253 = sbr.rel (%p251) target = $region36
        $region35: #{tpu_custom_call.1} parent=11 // pred_region
          _
        $region36: #{tpu_custom_call.1} parent=11 // pred_fallthru
          _
      $region12: #{tpu_custom_call.1} parent=5 // pred_fallthru
        _
      %p254 = scmp.lt.s32.totalorder %s17, 2
      // Predicated region
      $region37: #{tpu_custom_call.1} parent=5 // pred_check
        %p255 = pneg %p254
      $region38: #{tpu_custom_call.1} parent=5 // pred_check_branch
        %257 = sbr.rel (%p255) target = $region40
      $region39: #{tpu_custom_call.1} parent=5 // pred_region
        // Predicated region
        $region41: #{tpu_custom_call.1} parent=39 // pred_check
          %p258 = pneg %p37
        $region42: #{tpu_custom_call.1} parent=39 // pred_check_branch
          %260 = sbr.rel (%p258) target = $region44
        $region43: #{tpu_custom_call.1} parent=39 // pred_region
          %p261 = scmp.lt.s32.totalorder %s17, 1
          %s262 = scalar_select %p261, %s17, 1
          %s263 = smul.addr %s262, 8
          %s264 = scalar_lea.vmem %s0, %s263
        $region44: #{tpu_custom_call.1} parent=39 // pred_fallthru
          _
        // Predicated region
        $region45: #{tpu_custom_call.1} parent=39 // pred_check
          %p265 = pneg %p63
        $region46: #{tpu_custom_call.1} parent=39 // pred_check_branch
          %267 = sbr.rel (%p265) target = $region48
        $region47: #{tpu_custom_call.1} parent=39 // pred_region
          %p268 = scmp.lt.s32.totalorder %s17, 1
          %s269 = scalar_select %p268, %s17, 1
          %s270 = smul.addr %s269, 2
          %s271 = smul.addr %s270, 8
          %s272 = scalar_lea.vmem %s1, %s271
        $region48: #{tpu_custom_call.1} parent=39 // pred_fallthru
          _
      $region40: #{tpu_custom_call.1} parent=5 // pred_fallthru
        _
      %p273 = scmp.le.s32.totalorder 1, %s17
      %p274 = scmp.lt.s32.totalorder %s17, 3
      %p275 = pnand %p273, %p274
      %p276 = pneg %p275
      // Predicated region
      $region49: #{tpu_custom_call.1} parent=5 // pred_check
        _
      $region50: #{tpu_custom_call.1} parent=5 // pred_check_branch
        %278 = sbr.rel (%p275) target = $region52
      $region51: #{tpu_custom_call.1} parent=5 // pred_region
        %s279 = ssub.s32 %s17, 1
        %p280 = scmp.lt.s32.totalorder %s22, 1
        %s281 = scalar_select %p280, %s22, 1
        %s282 = smul.addr %s281, 8
        %s283 = scalar_lea.vmem %s0, %s282
        %p284 = pneg %p43
        %p285 = pneg %p40
        %p286 = scmp.lt.s32.totalorder %s22, 1
        %s287 = scalar_select %p286, %s22, 1
        %s288 = smul.addr %s287, 2
        %s289 = smul.addr %s288, 8
        %s290 = scalar_lea.vmem %s1, %s289
        %p291 = pneg %p69
        %p292 = pneg %p66
        %p293 = pneg %p90
        %p294 = pneg %p87
        %p295 = pneg %p111
        %p296 = pneg %p108
        %p297 = pneg %p132
        %p298 = pneg %p129
        %p299 = pneg %p153
        %p300 = pneg %p150
        %p301 = pneg %p174
        %p302 = pneg %p171
        %p303 = pneg %p195
        %p304 = pneg %p192
        %p305 = pneg %p221
        %p306 = pneg %p218
        %s307 = sand.u32 %s208, 1
        %s308 = scalar_lea.sflag [#allocation3], %s307
        %s309 = sand.u32 %s208, 1
        %s310 = smul.addr %s309, 8
        %s311 = scalar_lea.vmem [#allocation2], %s310
        %p312 = scmp.lt.s32.totalorder %s22, 1
        %s313 = scalar_select %p312, %s22, 1
        %s314 = smul.addr %s313, 8
        %s315 = scalar_lea.vmem %s0, %s314
        %p316 = scmp.lt.s32.totalorder %s22, 1
        %s317 = scalar_select %p316, %s22, 1
        %s318 = smul.addr %s317, 2
        %s319 = smul.addr %s318, 8
        %s320 = scalar_lea.vmem %s1, %s319
        %v322 = vld [vmem:[%s315] sm:$0xff]
        %v323 = vld [vmem:[%s320] sm:$0xff]
        %v324 = vld [vmem:[%s320 + $0x8] sm:$0xff]
        %v325 = vld [vmem:[%s2] sm:$0x3]
        %v326 = vld [vmem:[%s2 + $0x2] sm:$0x3]
        %v327 = vld [vmem:[%s2 + $0x4] sm:$0x3]
        %v328 = vld [vmem:[%s2 + $0x6] sm:$0x3]
        %v329 = vld [vmem:[%s2 + $0x8] sm:$0x3]
        %v330 = vld [vmem:[%s2 + $0xa] sm:$0x3]
        %v331 = vld [vmem:[%s2 + $0xc] sm:$0x3]
        %v332 = vld [vmem:[%s2 + $0xe] sm:$0x3]
        %v333 = vld [vmem:[%s2 + $0x10] sm:$0x3]
        %v334 = vld [vmem:[%s2 + $0x12] sm:$0x3]
        %v335 = vld [vmem:[%s2 + $0x14] sm:$0x3]
        %v336 = vld [vmem:[%s2 + $0x16] sm:$0x3]
        %v337 = vld [vmem:[%s2 + $0x18] sm:$0x3]
        %v338 = vld [vmem:[%s2 + $0x1a] sm:$0x3]
        %v339 = vld [vmem:[%s2 + $0x1c] sm:$0x3]
        %v340 = vld [vmem:[%s2 + $0x1e] sm:$0x3]
        %v341 = vld [vmem:[%s2 + $0x20] sm:$0x3]
        %v342 = vld [vmem:[%s2 + $0x22] sm:$0x3]
        %v343 = vld [vmem:[%s2 + $0x24] sm:$0x3]
        %v344 = vld [vmem:[%s2 + $0x26] sm:$0x3]
        %v345 = vld [vmem:[%s2 + $0x28] sm:$0x3]
        %v346 = vld [vmem:[%s2 + $0x2a] sm:$0x3]
        %v347 = vld [vmem:[%s2 + $0x2c] sm:$0x3]
        %v348 = vld [vmem:[%s2 + $0x2e] sm:$0x3]
        %v349 = vld [vmem:[%s2 + $0x30] sm:$0x3]
        %v350 = vld [vmem:[%s2 + $0x32] sm:$0x3]
        %v351 = vld [vmem:[%s2 + $0x34] sm:$0x3]
        %v352 = vld [vmem:[%s2 + $0x36] sm:$0x3]
        %v353 = vld [vmem:[%s2 + $0x38] sm:$0x3]
        %v354 = vld [vmem:[%s2 + $0x3a] sm:$0x3]
        %v355 = vld [vmem:[%s2 + $0x3c] sm:$0x3]
        %v356 = vld [vmem:[%s2 + $0x3e] sm:$0x3]
        %v357 = vld [vmem:[%s2 + $0x40] sm:$0x3]
        %v358 = vld [vmem:[%s2 + $0x42] sm:$0x3]
        %v359 = vld [vmem:[%s2 + $0x44] sm:$0x3]
        %v360 = vld [vmem:[%s2 + $0x46] sm:$0x3]
        %v361 = vld [vmem:[%s2 + $0x48] sm:$0x3]
        %v362 = vld [vmem:[%s2 + $0x4a] sm:$0x3]
        %v363 = vld [vmem:[%s2 + $0x4c] sm:$0x3]
        %v364 = vld [vmem:[%s2 + $0x4e] sm:$0x3]
        %v365 = vld [vmem:[%s2 + $0x50] sm:$0x3]
        %v366 = vld [vmem:[%s2 + $0x52] sm:$0x3]
        %v367 = vld [vmem:[%s2 + $0x54] sm:$0x3]
        %v368 = vld [vmem:[%s2 + $0x56] sm:$0x3]
        %v369 = vld [vmem:[%s2 + $0x58] sm:$0x3]
        %v370 = vld [vmem:[%s2 + $0x5a] sm:$0x3]
        %v371 = vld [vmem:[%s2 + $0x5c] sm:$0x3]
        %v372 = vld [vmem:[%s2 + $0x5e] sm:$0x3]
        %v373 = vld [vmem:[%s3] sm:$0x3]
        %v374 = vld [vmem:[%s3 + $0x2] sm:$0x3]
        %v375 = vld [vmem:[%s3 + $0x4] sm:$0x3]
        %v376 = vld [vmem:[%s3 + $0x6] sm:$0x3]
        %v377 = vld [vmem:[%s3 + $0x8] sm:$0x3]
        %v378 = vld [vmem:[%s3 + $0xa] sm:$0x3]
        %v379 = vld [vmem:[%s3 + $0xc] sm:$0x3]
        %v380 = vld [vmem:[%s3 + $0xe] sm:$0x3]
        %v381 = vld [vmem:[%s3 + $0x10] sm:$0x3]
        %v382 = vld [vmem:[%s3 + $0x12] sm:$0x3]
        %v383 = vld [vmem:[%s3 + $0x14] sm:$0x3]
        %v384 = vld [vmem:[%s3 + $0x16] sm:$0x3]
        %v385 = vld [vmem:[%s3 + $0x18] sm:$0x3]
        %v386 = vld [vmem:[%s3 + $0x1a] sm:$0x3]
        %v387 = vld [vmem:[%s3 + $0x1c] sm:$0x3]
        %v388 = vld [vmem:[%s3 + $0x1e] sm:$0x3]
        %v389 = vld [vmem:[%s7] sm:$0xff]
        %v390 = vld [vmem:[%s7 + $0x8] sm:$0x1]
        %vm391 = vcmask 261120
        %v392 = vsel %vm391, %v322, 0.0
        %393 = vadd.xlane.f32.xlu0 %v392
        %v394 = vpop.xlane.xlu0 %393
        %v395 = vrcp.pop 32.0
        %v396 = vmul.f32 32.0, %v395
        %v397 = vsub.f32 1.0, %v396
        %v398 = vmul.f32 %v395, %v397
        %v399 = vadd.f32 %v395, %v398
        %vm400 = vweird.f32 %v395
        %v401 = vsel %vm400, %v395, %v399
        %v402 = vmul.f32 %v394, %v401
        %v403 = vsub.f32 %v322, %v402
        %v404 = vmul.f32 %v403, %v403
        %v405 = vsel %vm391, %v404, 0.0
        %406 = vadd.xlane.f32.xlu0 %v405
        %v407 = vpop.xlane.xlu0 %406
        %v408 = vmul.f32 %v407, %v401
        %v409 = vadd.f32 %v408, 1e-05
        %v410 = vrsqrt.pop %v409
        %v411 = vmul.f32 %v410, %v409
        %v412 = vmul.f32 %v411, %v410
        %v413 = vmul.f32 0.5, %v412
        %v414 = vsub.f32 1.5, %v413
        %v415 = vmul.f32 %v410, %v414
        %vm416 = vweird.f32 %v409
        %vm417 = vweird.f32 %v410
        %vm418 = vmor %vm416, %vm417
        %v419 = vsel %vm418, %v410, %v415
        %v420 = vmul.f32 %v403, %v419
        %v421 = vperm.slane %v389, 0
        %v422 = vmul.f32 %v420, %v421
        %v423 = vperm.slane %v389, 1
        %v424 = vadd.f32 %v422, %v423
        %v425 = vpack.c.bf16 %v424, %v424
        %v426 = vpack.c.bf16 %v323, %v323
        %v427 = vpack.c.bf16 %v324, %v324
        %v429 = vsel %vm391, %v425, 0
        %v432 = vsel %vm391, %v325, 0
        %434 = vmatpush.bf16.xpose.msra.mxu0 0
        %435 = vmatpush.bf16.xpose.msra.mxu0 0
        %436 = vmatpush.bf16.xpose.msra.mxu0 0
        %437 = vmatpush.bf16.xpose.msra.mxu0 0
        %438 = vmatpush.bf16.xpose.msra.mxu0 0
        %439 = vmatpush.bf16.xpose.msra.mxu0 0
        %440 = vmatpush.bf16.xpose.msra.mxu0 0
        %441 = vmatpush.bf16.xpose.msra.mxu0 %v432
        %442 = vmatmul.bf16.gmra.mxu0 %v429
        %v443 = vpop.f32.mrf.mxu0
        %v444 = vadd.f32 0.0, %v443
        %v445 = vpop.f32.mrf.mxu0
        %446 = vdwg.mxu0
        %v448 = vsel %vm391, %v326, 0
        %450 = vmatpush.bf16.xpose.msra.mxu0 0
        %451 = vmatpush.bf16.xpose.msra.mxu0 0
        %452 = vmatpush.bf16.xpose.msra.mxu0 0
        %453 = vmatpush.bf16.xpose.msra.mxu0 0
        %454 = vmatpush.bf16.xpose.msra.mxu0 0
        %455 = vmatpush.bf16.xpose.msra.mxu0 0
        %456 = vmatpush.bf16.xpose.msra.mxu0 0
        %457 = vmatpush.bf16.xpose.msra.mxu0 %v448
        %458 = vmatmul.bf16.gmra.mxu0 %v429
        %v459 = vpop.f32.mrf.mxu0
        %v460 = vadd.f32 0.0, %v459
        %v461 = vpop.f32.mrf.mxu0
        %462 = vdwg.mxu0
        %v464 = vsel %vm391, %v327, 0
        %466 = vmatpush.bf16.xpose.msra.mxu0 0
        %467 = vmatpush.bf16.xpose.msra.mxu0 0
        %468 = vmatpush.bf16.xpose.msra.mxu0 0
        %469 = vmatpush.bf16.xpose.msra.mxu0 0
        %470 = vmatpush.bf16.xpose.msra.mxu0 0
        %471 = vmatpush.bf16.xpose.msra.mxu0 0
        %472 = vmatpush.bf16.xpose.msra.mxu0 0
        %473 = vmatpush.bf16.xpose.msra.mxu0 %v464
        %474 = vmatmul.bf16.gmra.mxu0 %v429
        %v475 = vpop.f32.mrf.mxu0
        %v476 = vadd.f32 0.0, %v475
        %v477 = vpop.f32.mrf.mxu0
        %478 = vdwg.mxu0
        %v480 = vsel %vm391, %v328, 0
        %482 = vmatpush.bf16.xpose.msra.mxu0 0
        %483 = vmatpush.bf16.xpose.msra.mxu0 0
        %484 = vmatpush.bf16.xpose.msra.mxu0 0
        %485 = vmatpush.bf16.xpose.msra.mxu0 0
        %486 = vmatpush.bf16.xpose.msra.mxu0 0
        %487 = vmatpush.bf16.xpose.msra.mxu0 0
        %488 = vmatpush.bf16.xpose.msra.mxu0 0
        %489 = vmatpush.bf16.xpose.msra.mxu0 %v480
        %490 = vmatmul.bf16.gmra.mxu0 %v429
        %v491 = vpop.f32.mrf.mxu0
        %v492 = vadd.f32 0.0, %v491
        %v493 = vpop.f32.mrf.mxu0
        %494 = vdwg.mxu0
        %v496 = vsel %vm391, %v329, 0
        %498 = vmatpush.bf16.xpose.msra.mxu0 0
        %499 = vmatpush.bf16.xpose.msra.mxu0 0
        %500 = vmatpush.bf16.xpose.msra.mxu0 0
        %501 = vmatpush.bf16.xpose.msra.mxu0 0
        %502 = vmatpush.bf16.xpose.msra.mxu0 0
        %503 = vmatpush.bf16.xpose.msra.mxu0 0
        %504 = vmatpush.bf16.xpose.msra.mxu0 0
        %505 = vmatpush.bf16.xpose.msra.mxu0 %v496
        %506 = vmatmul.bf16.gmra.mxu0 %v429
        %v507 = vpop.f32.mrf.mxu0
        %v508 = vadd.f32 0.0, %v507
        %v509 = vpop.f32.mrf.mxu0
        %510 = vdwg.mxu0
        %v512 = vsel %vm391, %v330, 0
        %514 = vmatpush.bf16.xpose.msra.mxu0 0
        %515 = vmatpush.bf16.xpose.msra.mxu0 0
        %516 = vmatpush.bf16.xpose.msra.mxu0 0
        %517 = vmatpush.bf16.xpose.msra.mxu0 0
        %518 = vmatpush.bf16.xpose.msra.mxu0 0
        %519 = vmatpush.bf16.xpose.msra.mxu0 0
        %520 = vmatpush.bf16.xpose.msra.mxu0 0
        %521 = vmatpush.bf16.xpose.msra.mxu0 %v512
        %522 = vmatmul.bf16.gmra.mxu0 %v429
        %v523 = vpop.f32.mrf.mxu0
        %v524 = vadd.f32 0.0, %v523
        %v525 = vpop.f32.mrf.mxu0
        %526 = vdwg.mxu0
        %v528 = vsel %vm391, %v331, 0
        %530 = vmatpush.bf16.xpose.msra.mxu0 0
        %531 = vmatpush.bf16.xpose.msra.mxu0 0
        %532 = vmatpush.bf16.xpose.msra.mxu0 0
        %533 = vmatpush.bf16.xpose.msra.mxu0 0
        %534 = vmatpush.bf16.xpose.msra.mxu0 0
        %535 = vmatpush.bf16.xpose.msra.mxu0 0
        %536 = vmatpush.bf16.xpose.msra.mxu0 0
        %537 = vmatpush.bf16.xpose.msra.mxu0 %v528
        %538 = vmatmul.bf16.gmra.mxu0 %v429
        %v539 = vpop.f32.mrf.mxu0
        %v540 = vadd.f32 0.0, %v539
        %v541 = vpop.f32.mrf.mxu0
        %542 = vdwg.mxu0
        %v544 = vsel %vm391, %v332, 0
        %546 = vmatpush.bf16.xpose.msra.mxu0 0
        %547 = vmatpush.bf16.xpose.msra.mxu0 0
        %548 = vmatpush.bf16.xpose.msra.mxu0 0
        %549 = vmatpush.bf16.xpose.msra.mxu0 0
        %550 = vmatpush.bf16.xpose.msra.mxu0 0
        %551 = vmatpush.bf16.xpose.msra.mxu0 0
        %552 = vmatpush.bf16.xpose.msra.mxu0 0
        %553 = vmatpush.bf16.xpose.msra.mxu0 %v544
        %554 = vmatmul.bf16.gmra.mxu0 %v429
        %v555 = vpop.f32.mrf.mxu0
        %v556 = vadd.f32 0.0, %v555
        %v557 = vpop.f32.mrf.mxu0
        %558 = vdwg.mxu0
        %v561 = vunpack.c.l.b16 %v426
        %v562 = vunpack.c.l.b16 %v427
        %v563 = vpack.c.b16 %v562, %v561
        %v565 = vsel %vm391, %v563, 0
        %v568 = vsel %vm391, %v333, 0
        %570 = vmatpush.bf16.xpose.msra.mxu0 0
        %571 = vmatpush.bf16.xpose.msra.mxu0 0
        %572 = vmatpush.bf16.xpose.msra.mxu0 0
        %573 = vmatpush.bf16.xpose.msra.mxu0 0
        %574 = vmatpush.bf16.xpose.msra.mxu0 0
        %575 = vmatpush.bf16.xpose.msra.mxu0 0
        %576 = vmatpush.bf16.xpose.msra.mxu0 0
        %577 = vmatpush.bf16.xpose.msra.mxu0 %v568
        %578 = vmatmul.bf16.gmra.mxu0 %v565
        %v579 = vpop.f32.mrf.mxu0
        %v580 = vadd.f32 0.0, %v579
        %v581 = vpop.f32.mrf.mxu0
        %v582 = vadd.f32 0.0, %v581
        %583 = vdwg.mxu0
        %v585 = vsel %vm391, %v334, 0
        %587 = vmatpush.bf16.xpose.msra.mxu0 0
        %588 = vmatpush.bf16.xpose.msra.mxu0 0
        %589 = vmatpush.bf16.xpose.msra.mxu0 0
        %590 = vmatpush.bf16.xpose.msra.mxu0 0
        %591 = vmatpush.bf16.xpose.msra.mxu0 0
        %592 = vmatpush.bf16.xpose.msra.mxu0 0
        %593 = vmatpush.bf16.xpose.msra.mxu0 0
        %594 = vmatpush.bf16.xpose.msra.mxu0 %v585
        %595 = vmatmul.bf16.gmra.mxu0 %v565
        %v596 = vpop.f32.mrf.mxu0
        %v597 = vadd.f32 0.0, %v596
        %v598 = vpop.f32.mrf.mxu0
        %v599 = vadd.f32 0.0, %v598
        %600 = vdwg.mxu0
        %v602 = vsel %vm391, %v335, 0
        %604 = vmatpush.bf16.xpose.msra.mxu0 0
        %605 = vmatpush.bf16.xpose.msra.mxu0 0
        %606 = vmatpush.bf16.xpose.msra.mxu0 0
        %607 = vmatpush.bf16.xpose.msra.mxu0 0
        %608 = vmatpush.bf16.xpose.msra.mxu0 0
        %609 = vmatpush.bf16.xpose.msra.mxu0 0
        %610 = vmatpush.bf16.xpose.msra.mxu0 0
        %611 = vmatpush.bf16.xpose.msra.mxu0 %v602
        %612 = vmatmul.bf16.gmra.mxu0 %v565
        %v613 = vpop.f32.mrf.mxu0
        %v614 = vadd.f32 0.0, %v613
        %v615 = vpop.f32.mrf.mxu0
        %v616 = vadd.f32 0.0, %v615
        %617 = vdwg.mxu0
        %v619 = vsel %vm391, %v336, 0
        %621 = vmatpush.bf16.xpose.msra.mxu0 0
        %622 = vmatpush.bf16.xpose.msra.mxu0 0
        %623 = vmatpush.bf16.xpose.msra.mxu0 0
        %624 = vmatpush.bf16.xpose.msra.mxu0 0
        %625 = vmatpush.bf16.xpose.msra.mxu0 0
        %626 = vmatpush.bf16.xpose.msra.mxu0 0
        %627 = vmatpush.bf16.xpose.msra.mxu0 0
        %628 = vmatpush.bf16.xpose.msra.mxu0 %v619
        %629 = vmatmul.bf16.gmra.mxu0 %v565
        %v630 = vpop.f32.mrf.mxu0
        %v631 = vadd.f32 0.0, %v630
        %v632 = vpop.f32.mrf.mxu0
        %v633 = vadd.f32 0.0, %v632
        %634 = vdwg.mxu0
        %v636 = vsel %vm391, %v337, 0
        %638 = vmatpush.bf16.xpose.msra.mxu0 0
        %639 = vmatpush.bf16.xpose.msra.mxu0 0
        %640 = vmatpush.bf16.xpose.msra.mxu0 0
        %641 = vmatpush.bf16.xpose.msra.mxu0 0
        %642 = vmatpush.bf16.xpose.msra.mxu0 0
        %643 = vmatpush.bf16.xpose.msra.mxu0 0
        %644 = vmatpush.bf16.xpose.msra.mxu0 0
        %645 = vmatpush.bf16.xpose.msra.mxu0 %v636
        %646 = vmatmul.bf16.gmra.mxu0 %v565
        %v647 = vpop.f32.mrf.mxu0
        %v648 = vadd.f32 0.0, %v647
        %v649 = vpop.f32.mrf.mxu0
        %v650 = vadd.f32 0.0, %v649
        %651 = vdwg.mxu0
        %v653 = vsel %vm391, %v338, 0
        %655 = vmatpush.bf16.xpose.msra.mxu0 0
        %656 = vmatpush.bf16.xpose.msra.mxu0 0
        %657 = vmatpush.bf16.xpose.msra.mxu0 0
        %658 = vmatpush.bf16.xpose.msra.mxu0 0
        %659 = vmatpush.bf16.xpose.msra.mxu0 0
        %660 = vmatpush.bf16.xpose.msra.mxu0 0
        %661 = vmatpush.bf16.xpose.msra.mxu0 0
        %662 = vmatpush.bf16.xpose.msra.mxu0 %v653
        %663 = vmatmul.bf16.gmra.mxu0 %v565
        %v664 = vpop.f32.mrf.mxu0
        %v665 = vadd.f32 0.0, %v664
        %v666 = vpop.f32.mrf.mxu0
        %v667 = vadd.f32 0.0, %v666
        %668 = vdwg.mxu0
        %v670 = vsel %vm391, %v339, 0
        %672 = vmatpush.bf16.xpose.msra.mxu0 0
        %673 = vmatpush.bf16.xpose.msra.mxu0 0
        %674 = vmatpush.bf16.xpose.msra.mxu0 0
        %675 = vmatpush.bf16.xpose.msra.mxu0 0
        %676 = vmatpush.bf16.xpose.msra.mxu0 0
        %677 = vmatpush.bf16.xpose.msra.mxu0 0
        %678 = vmatpush.bf16.xpose.msra.mxu0 0
        %679 = vmatpush.bf16.xpose.msra.mxu0 %v670
        %680 = vmatmul.bf16.gmra.mxu0 %v565
        %v681 = vpop.f32.mrf.mxu0
        %v682 = vadd.f32 0.0, %v681
        %v683 = vpop.f32.mrf.mxu0
        %v684 = vadd.f32 0.0, %v683
        %685 = vdwg.mxu0
        %v687 = vsel %vm391, %v340, 0
        %689 = vmatpush.bf16.xpose.msra.mxu0 0
        %690 = vmatpush.bf16.xpose.msra.mxu0 0
        %691 = vmatpush.bf16.xpose.msra.mxu0 0
        %692 = vmatpush.bf16.xpose.msra.mxu0 0
        %693 = vmatpush.bf16.xpose.msra.mxu0 0
        %694 = vmatpush.bf16.xpose.msra.mxu0 0
        %695 = vmatpush.bf16.xpose.msra.mxu0 0
        %696 = vmatpush.bf16.xpose.msra.mxu0 %v687
        %697 = vmatmul.bf16.gmra.mxu0 %v565
        %v698 = vpop.f32.mrf.mxu0
        %v699 = vadd.f32 0.0, %v698
        %v700 = vpop.f32.mrf.mxu0
        %v701 = vadd.f32 0.0, %v700
        %702 = vdwg.mxu0
        %v704 = vsel %vm391, %v341, 0
        %706 = vmatpush.bf16.xpose.msra.mxu0 0
        %707 = vmatpush.bf16.xpose.msra.mxu0 0
        %708 = vmatpush.bf16.xpose.msra.mxu0 0
        %709 = vmatpush.bf16.xpose.msra.mxu0 0
        %710 = vmatpush.bf16.xpose.msra.mxu0 0
        %711 = vmatpush.bf16.xpose.msra.mxu0 0
        %712 = vmatpush.bf16.xpose.msra.mxu0 0
        %713 = vmatpush.bf16.xpose.msra.mxu0 %v704
        %714 = vmatmul.bf16.gmra.mxu0 %v565
        %v715 = vpop.f32.mrf.mxu0
        %v716 = vadd.f32 0.0, %v715
        %v717 = vpop.f32.mrf.mxu0
        %v718 = vadd.f32 0.0, %v717
        %719 = vdwg.mxu0
        %v721 = vsel %vm391, %v342, 0
        %723 = vmatpush.bf16.xpose.msra.mxu0 0
        %724 = vmatpush.bf16.xpose.msra.mxu0 0
        %725 = vmatpush.bf16.xpose.msra.mxu0 0
        %726 = vmatpush.bf16.xpose.msra.mxu0 0
        %727 = vmatpush.bf16.xpose.msra.mxu0 0
        %728 = vmatpush.bf16.xpose.msra.mxu0 0
        %729 = vmatpush.bf16.xpose.msra.mxu0 0
        %730 = vmatpush.bf16.xpose.msra.mxu0 %v721
        %731 = vmatmul.bf16.gmra.mxu0 %v565
        %v732 = vpop.f32.mrf.mxu0
        %v733 = vadd.f32 0.0, %v732
        %v734 = vpop.f32.mrf.mxu0
        %v735 = vadd.f32 0.0, %v734
        %736 = vdwg.mxu0
        %v738 = vsel %vm391, %v343, 0
        %740 = vmatpush.bf16.xpose.msra.mxu0 0
        %741 = vmatpush.bf16.xpose.msra.mxu0 0
        %742 = vmatpush.bf16.xpose.msra.mxu0 0
        %743 = vmatpush.bf16.xpose.msra.mxu0 0
        %744 = vmatpush.bf16.xpose.msra.mxu0 0
        %745 = vmatpush.bf16.xpose.msra.mxu0 0
        %746 = vmatpush.bf16.xpose.msra.mxu0 0
        %747 = vmatpush.bf16.xpose.msra.mxu0 %v738
        %748 = vmatmul.bf16.gmra.mxu0 %v565
        %v749 = vpop.f32.mrf.mxu0
        %v750 = vadd.f32 0.0, %v749
        %v751 = vpop.f32.mrf.mxu0
        %v752 = vadd.f32 0.0, %v751
        %753 = vdwg.mxu0
        %v755 = vsel %vm391, %v344, 0
        %757 = vmatpush.bf16.xpose.msra.mxu0 0
        %758 = vmatpush.bf16.xpose.msra.mxu0 0
        %759 = vmatpush.bf16.xpose.msra.mxu0 0
        %760 = vmatpush.bf16.xpose.msra.mxu0 0
        %761 = vmatpush.bf16.xpose.msra.mxu0 0
        %762 = vmatpush.bf16.xpose.msra.mxu0 0
        %763 = vmatpush.bf16.xpose.msra.mxu0 0
        %764 = vmatpush.bf16.xpose.msra.mxu0 %v755
        %765 = vmatmul.bf16.gmra.mxu0 %v565
        %v766 = vpop.f32.mrf.mxu0
        %v767 = vadd.f32 0.0, %v766
        %v768 = vpop.f32.mrf.mxu0
        %v769 = vadd.f32 0.0, %v768
        %770 = vdwg.mxu0
        %v772 = vsel %vm391, %v345, 0
        %774 = vmatpush.bf16.xpose.msra.mxu0 0
        %775 = vmatpush.bf16.xpose.msra.mxu0 0
        %776 = vmatpush.bf16.xpose.msra.mxu0 0
        %777 = vmatpush.bf16.xpose.msra.mxu0 0
        %778 = vmatpush.bf16.xpose.msra.mxu0 0
        %779 = vmatpush.bf16.xpose.msra.mxu0 0
        %780 = vmatpush.bf16.xpose.msra.mxu0 0
        %781 = vmatpush.bf16.xpose.msra.mxu0 %v772
        %782 = vmatmul.bf16.gmra.mxu0 %v565
        %v783 = vpop.f32.mrf.mxu0
        %v784 = vadd.f32 0.0, %v783
        %v785 = vpop.f32.mrf.mxu0
        %v786 = vadd.f32 0.0, %v785
        %787 = vdwg.mxu0
        %v789 = vsel %vm391, %v346, 0
        %791 = vmatpush.bf16.xpose.msra.mxu0 0
        %792 = vmatpush.bf16.xpose.msra.mxu0 0
        %793 = vmatpush.bf16.xpose.msra.mxu0 0
        %794 = vmatpush.bf16.xpose.msra.mxu0 0
        %795 = vmatpush.bf16.xpose.msra.mxu0 0
        %796 = vmatpush.bf16.xpose.msra.mxu0 0
        %797 = vmatpush.bf16.xpose.msra.mxu0 0
        %798 = vmatpush.bf16.xpose.msra.mxu0 %v789
        %799 = vmatmul.bf16.gmra.mxu0 %v565
        %v800 = vpop.f32.mrf.mxu0
        %v801 = vadd.f32 0.0, %v800
        %v802 = vpop.f32.mrf.mxu0
        %v803 = vadd.f32 0.0, %v802
        %804 = vdwg.mxu0
        %v806 = vsel %vm391, %v347, 0
        %808 = vmatpush.bf16.xpose.msra.mxu0 0
        %809 = vmatpush.bf16.xpose.msra.mxu0 0
        %810 = vmatpush.bf16.xpose.msra.mxu0 0
        %811 = vmatpush.bf16.xpose.msra.mxu0 0
        %812 = vmatpush.bf16.xpose.msra.mxu0 0
        %813 = vmatpush.bf16.xpose.msra.mxu0 0
        %814 = vmatpush.bf16.xpose.msra.mxu0 0
        %815 = vmatpush.bf16.xpose.msra.mxu0 %v806
        %816 = vmatmul.bf16.gmra.mxu0 %v565
        %v817 = vpop.f32.mrf.mxu0
        %v818 = vadd.f32 0.0, %v817
        %v819 = vpop.f32.mrf.mxu0
        %v820 = vadd.f32 0.0, %v819
        %821 = vdwg.mxu0
        %v823 = vsel %vm391, %v348, 0
        %825 = vmatpush.bf16.xpose.msra.mxu0 0
        %826 = vmatpush.bf16.xpose.msra.mxu0 0
        %827 = vmatpush.bf16.xpose.msra.mxu0 0
        %828 = vmatpush.bf16.xpose.msra.mxu0 0
        %829 = vmatpush.bf16.xpose.msra.mxu0 0
        %830 = vmatpush.bf16.xpose.msra.mxu0 0
        %831 = vmatpush.bf16.xpose.msra.mxu0 0
        %832 = vmatpush.bf16.xpose.msra.mxu0 %v823
        %833 = vmatmul.bf16.gmra.mxu0 %v565
        %v834 = vpop.f32.mrf.mxu0
        %v835 = vadd.f32 0.0, %v834
        %v836 = vpop.f32.mrf.mxu0
        %v837 = vadd.f32 0.0, %v836
        %838 = vdwg.mxu0
        %v839 = vpack.c.bf16 %v444, %v444
        %v840 = vpack.c.bf16 %v460, %v460
        %v841 = vpack.c.bf16 %v476, %v476
        %v842 = vpack.c.bf16 %v492, %v492
        %v843 = vpack.c.bf16 %v508, %v508
        %v844 = vpack.c.bf16 %v524, %v524
        %v845 = vpack.c.bf16 %v540, %v540
        %v846 = vpack.c.bf16 %v556, %v556
        %v847 = vpack.c.bf16 %v580, %v580
        %v848 = vpack.c.bf16 %v582, %v582
        %v849 = vpack.c.bf16 %v597, %v597
        %v850 = vpack.c.bf16 %v599, %v599
        %v851 = vpack.c.bf16 %v614, %v614
        %v852 = vpack.c.bf16 %v616, %v616
        %v853 = vpack.c.bf16 %v631, %v631
        %v854 = vpack.c.bf16 %v633, %v633
        %v855 = vpack.c.bf16 %v648, %v648
        %v856 = vpack.c.bf16 %v650, %v650
        %v857 = vpack.c.bf16 %v665, %v665
        %v858 = vpack.c.bf16 %v667, %v667
        %v859 = vpack.c.bf16 %v682, %v682
        %v860 = vpack.c.bf16 %v684, %v684
        %v861 = vpack.c.bf16 %v699, %v699
        %v862 = vpack.c.bf16 %v701, %v701
        %v865 = vunpack.c.l.b16 %v847
        %v866 = vunpack.c.l.b16 %v848
        %v867 = vpack.c.b16 %v866, %v865
        %vm868 = vcmask 31744
        %v870 = vsel %vm868, %v839, 0
        %v873 = vsel %vm868, %v867, 0
        %875 = vmatpush.bf16.xpose.msra.mxu0 0
        %876 = vmatpush.bf16.xpose.msra.mxu0 0
        %877 = vmatpush.bf16.xpose.msra.mxu0 0
        %878 = vmatpush.bf16.xpose.msra.mxu0 0
        %879 = vmatpush.bf16.xpose.msra.mxu0 0
        %880 = vmatpush.bf16.xpose.msra.mxu0 0
        %881 = vmatpush.bf16.xpose.msra.mxu0 0
        %882 = vmatpush.bf16.xpose.msra.mxu0 %v873
        %883 = vmatmul.bf16.gmra.mxu0 %v870
        %v884 = vpop.f32.mrf.mxu0
        %v885 = vadd.f32 0.0, %v884
        %v886 = vpop.f32.mrf.mxu0
        %887 = vdwg.mxu0
        %v890 = vunpack.c.l.b16 %v849
        %v891 = vunpack.c.l.b16 %v850
        %v892 = vpack.c.b16 %v891, %v890
        %v894 = vsel %vm868, %v840, 0
        %v897 = vsel %vm868, %v892, 0
        %899 = vmatpush.bf16.xpose.msra.mxu0 0
        %900 = vmatpush.bf16.xpose.msra.mxu0 0
        %901 = vmatpush.bf16.xpose.msra.mxu0 0
        %902 = vmatpush.bf16.xpose.msra.mxu0 0
        %903 = vmatpush.bf16.xpose.msra.mxu0 0
        %904 = vmatpush.bf16.xpose.msra.mxu0 0
        %905 = vmatpush.bf16.xpose.msra.mxu0 0
        %906 = vmatpush.bf16.xpose.msra.mxu0 %v897
        %907 = vmatmul.bf16.gmra.mxu0 %v894
        %v908 = vpop.f32.mrf.mxu0
        %v909 = vadd.f32 0.0, %v908
        %v910 = vpop.f32.mrf.mxu0
        %911 = vdwg.mxu0
        %v914 = vunpack.c.l.b16 %v851
        %v915 = vunpack.c.l.b16 %v852
        %v916 = vpack.c.b16 %v915, %v914
        %v918 = vsel %vm868, %v841, 0
        %v921 = vsel %vm868, %v916, 0
        %923 = vmatpush.bf16.xpose.msra.mxu0 0
        %924 = vmatpush.bf16.xpose.msra.mxu0 0
        %925 = vmatpush.bf16.xpose.msra.mxu0 0
        %926 = vmatpush.bf16.xpose.msra.mxu0 0
        %927 = vmatpush.bf16.xpose.msra.mxu0 0
        %928 = vmatpush.bf16.xpose.msra.mxu0 0
        %929 = vmatpush.bf16.xpose.msra.mxu0 0
        %930 = vmatpush.bf16.xpose.msra.mxu0 %v921
        %931 = vmatmul.bf16.gmra.mxu0 %v918
        %v932 = vpop.f32.mrf.mxu0
        %v933 = vadd.f32 0.0, %v932
        %v934 = vpop.f32.mrf.mxu0
        %935 = vdwg.mxu0
        %v938 = vunpack.c.l.b16 %v853
        %v939 = vunpack.c.l.b16 %v854
        %v940 = vpack.c.b16 %v939, %v938
        %v942 = vsel %vm868, %v842, 0
        %v945 = vsel %vm868, %v940, 0
        %947 = vmatpush.bf16.xpose.msra.mxu0 0
        %948 = vmatpush.bf16.xpose.msra.mxu0 0
        %949 = vmatpush.bf16.xpose.msra.mxu0 0
        %950 = vmatpush.bf16.xpose.msra.mxu0 0
        %951 = vmatpush.bf16.xpose.msra.mxu0 0
        %952 = vmatpush.bf16.xpose.msra.mxu0 0
        %953 = vmatpush.bf16.xpose.msra.mxu0 0
        %954 = vmatpush.bf16.xpose.msra.mxu0 %v945
        %955 = vmatmul.bf16.gmra.mxu0 %v942
        %v956 = vpop.f32.mrf.mxu0
        %v957 = vadd.f32 0.0, %v956
        %v958 = vpop.f32.mrf.mxu0
        %959 = vdwg.mxu0
        %v962 = vunpack.c.l.b16 %v855
        %v963 = vunpack.c.l.b16 %v856
        %v964 = vpack.c.b16 %v963, %v962
        %v966 = vsel %vm868, %v843, 0
        %v969 = vsel %vm868, %v964, 0
        %971 = vmatpush.bf16.xpose.msra.mxu0 0
        %972 = vmatpush.bf16.xpose.msra.mxu0 0
        %973 = vmatpush.bf16.xpose.msra.mxu0 0
        %974 = vmatpush.bf16.xpose.msra.mxu0 0
        %975 = vmatpush.bf16.xpose.msra.mxu0 0
        %976 = vmatpush.bf16.xpose.msra.mxu0 0
        %977 = vmatpush.bf16.xpose.msra.mxu0 0
        %978 = vmatpush.bf16.xpose.msra.mxu0 %v969
        %979 = vmatmul.bf16.gmra.mxu0 %v966
        %v980 = vpop.f32.mrf.mxu0
        %v981 = vadd.f32 0.0, %v980
        %v982 = vpop.f32.mrf.mxu0
        %983 = vdwg.mxu0
        %v986 = vunpack.c.l.b16 %v857
        %v987 = vunpack.c.l.b16 %v858
        %v988 = vpack.c.b16 %v987, %v986
        %v990 = vsel %vm868, %v844, 0
        %v993 = vsel %vm868, %v988, 0
        %995 = vmatpush.bf16.xpose.msra.mxu0 0
        %996 = vmatpush.bf16.xpose.msra.mxu0 0
        %997 = vmatpush.bf16.xpose.msra.mxu0 0
        %998 = vmatpush.bf16.xpose.msra.mxu0 0
        %999 = vmatpush.bf16.xpose.msra.mxu0 0
        %1000 = vmatpush.bf16.xpose.msra.mxu0 0
        %1001 = vmatpush.bf16.xpose.msra.mxu0 0
        %1002 = vmatpush.bf16.xpose.msra.mxu0 %v993
        %1003 = vmatmul.bf16.gmra.mxu0 %v990
        %v1004 = vpop.f32.mrf.mxu0
        %v1005 = vadd.f32 0.0, %v1004
        %v1006 = vpop.f32.mrf.mxu0
        %1007 = vdwg.mxu0
        %v1010 = vunpack.c.l.b16 %v859
        %v1011 = vunpack.c.l.b16 %v860
        %v1012 = vpack.c.b16 %v1011, %v1010
        %v1014 = vsel %vm868, %v845, 0
        %v1017 = vsel %vm868, %v1012, 0
        %1019 = vmatpush.bf16.xpose.msra.mxu0 0
        %1020 = vmatpush.bf16.xpose.msra.mxu0 0
        %1021 = vmatpush.bf16.xpose.msra.mxu0 0
        %1022 = vmatpush.bf16.xpose.msra.mxu0 0
        %1023 = vmatpush.bf16.xpose.msra.mxu0 0
        %1024 = vmatpush.bf16.xpose.msra.mxu0 0
        %1025 = vmatpush.bf16.xpose.msra.mxu0 0
        %1026 = vmatpush.bf16.xpose.msra.mxu0 %v1017
        %1027 = vmatmul.bf16.gmra.mxu0 %v1014
        %v1028 = vpop.f32.mrf.mxu0
        %v1029 = vadd.f32 0.0, %v1028
        %v1030 = vpop.f32.mrf.mxu0
        %1031 = vdwg.mxu0
        %v1034 = vunpack.c.l.b16 %v861
        %v1035 = vunpack.c.l.b16 %v862
        %v1036 = vpack.c.b16 %v1035, %v1034
        %v1038 = vsel %vm868, %v846, 0
        %v1041 = vsel %vm868, %v1036, 0
        %1043 = vmatpush.bf16.xpose.msra.mxu0 0
        %1044 = vmatpush.bf16.xpose.msra.mxu0 0
        %1045 = vmatpush.bf16.xpose.msra.mxu0 0
        %1046 = vmatpush.bf16.xpose.msra.mxu0 0
        %1047 = vmatpush.bf16.xpose.msra.mxu0 0
        %1048 = vmatpush.bf16.xpose.msra.mxu0 0
        %1049 = vmatpush.bf16.xpose.msra.mxu0 0
        %1050 = vmatpush.bf16.xpose.msra.mxu0 %v1041
        %1051 = vmatmul.bf16.gmra.mxu0 %v1038
        %v1052 = vpop.f32.mrf.mxu0
        %v1053 = vadd.f32 0.0, %v1052
        %v1054 = vpop.f32.mrf.mxu0
        %1055 = vdwg.mxu0
        %vm1056 = vcmask 130048
        %v1057 = vsel %vm1056, %v885, -inf
        %1058 = vmax.xlane.f32.xlu0 %v1057
        %v1059 = vpop.xlane.xlu0 %1058
        %v1060 = vsel %vm1056, %v909, -inf
        %1061 = vmax.xlane.f32.xlu0 %v1060
        %v1062 = vpop.xlane.xlu0 %1061
        %v1063 = vsel %vm1056, %v933, -inf
        %1064 = vmax.xlane.f32.xlu0 %v1063
        %v1065 = vpop.xlane.xlu0 %1064
        %v1066 = vsel %vm1056, %v957, -inf
        %1067 = vmax.xlane.f32.xlu0 %v1066
        %v1068 = vpop.xlane.xlu0 %1067
        %v1069 = vsel %vm1056, %v981, -inf
        %1070 = vmax.xlane.f32.xlu0 %v1069
        %v1071 = vpop.xlane.xlu0 %1070
        %v1072 = vsel %vm1056, %v1005, -inf
        %1073 = vmax.xlane.f32.xlu0 %v1072
        %v1074 = vpop.xlane.xlu0 %1073
        %v1075 = vsel %vm1056, %v1029, -inf
        %1076 = vmax.xlane.f32.xlu0 %v1075
        %v1077 = vpop.xlane.xlu0 %1076
        %v1078 = vsel %vm1056, %v1053, -inf
        %1079 = vmax.xlane.f32.xlu0 %v1078
        %v1080 = vpop.xlane.xlu0 %1079
        %v1081 = vsub.f32 %v885, %v1059
        %v1082 = vsub.f32 %v909, %v1062
        %v1083 = vsub.f32 %v933, %v1065
        %v1084 = vsub.f32 %v957, %v1068
        %v1085 = vsub.f32 %v981, %v1071
        %v1086 = vsub.f32 %v1005, %v1074
        %v1087 = vsub.f32 %v1029, %v1077
        %v1088 = vsub.f32 %v1053, %v1080
        %v1089 = vmul.f32 %v1081, 1.442695
        %v1090 = vpow.pop %v1089
        %v1091 = vmul.f32 %v1082, 1.442695
        %v1092 = vpow.pop %v1091
        %v1093 = vmul.f32 %v1083, 1.442695
        %v1094 = vpow.pop %v1093
        %v1095 = vmul.f32 %v1084, 1.442695
        %v1096 = vpow.pop %v1095
        %v1097 = vmul.f32 %v1085, 1.442695
        %v1098 = vpow.pop %v1097
        %v1099 = vmul.f32 %v1086, 1.442695
        %v1100 = vpow.pop %v1099
        %v1101 = vmul.f32 %v1087, 1.442695
        %v1102 = vpow.pop %v1101
        %v1103 = vmul.f32 %v1088, 1.442695
        %v1104 = vpow.pop %v1103
        %v1105 = vsel %vm1056, %v1090, 0.0
        %1106 = vadd.xlane.f32.xlu0 %v1105
        %v1107 = vpop.xlane.xlu0 %1106
        %v1108 = vsel %vm1056, %v1092, 0.0
        %1109 = vadd.xlane.f32.xlu0 %v1108
        %v1110 = vpop.xlane.xlu0 %1109
        %v1111 = vsel %vm1056, %v1094, 0.0
        %1112 = vadd.xlane.f32.xlu0 %v1111
        %v1113 = vpop.xlane.xlu0 %1112
        %v1114 = vsel %vm1056, %v1096, 0.0
        %1115 = vadd.xlane.f32.xlu0 %v1114
        %v1116 = vpop.xlane.xlu0 %1115
        %v1117 = vsel %vm1056, %v1098, 0.0
        %1118 = vadd.xlane.f32.xlu0 %v1117
        %v1119 = vpop.xlane.xlu0 %1118
        %v1120 = vsel %vm1056, %v1100, 0.0
        %1121 = vadd.xlane.f32.xlu0 %v1120
        %v1122 = vpop.xlane.xlu0 %1121
        %v1123 = vsel %vm1056, %v1102, 0.0
        %1124 = vadd.xlane.f32.xlu0 %v1123
        %v1125 = vpop.xlane.xlu0 %1124
        %v1126 = vsel %vm1056, %v1104, 0.0
        %1127 = vadd.xlane.f32.xlu0 %v1126
        %v1128 = vpop.xlane.xlu0 %1127
        %v1129 = vrcp.pop %v1107
        %v1130 = vrcp.pop %v1110
        %v1131 = vrcp.pop %v1113
        %v1132 = vrcp.pop %v1116
        %v1133 = vrcp.pop %v1119
        %v1134 = vrcp.pop %v1122
        %v1135 = vrcp.pop %v1125
        %v1136 = vrcp.pop %v1128
        %v1137 = vmul.f32 %v1090, %v1129
        %v1138 = vmul.f32 %v1092, %v1130
        %v1139 = vmul.f32 %v1094, %v1131
        %v1140 = vmul.f32 %v1096, %v1132
        %v1141 = vmul.f32 %v1098, %v1133
        %v1142 = vmul.f32 %v1100, %v1134
        %v1143 = vmul.f32 %v1102, %v1135
        %v1144 = vmul.f32 %v1104, %v1136
        %v1145 = vpack.c.bf16 %v1137, %v1137
        %v1146 = vpack.c.bf16 %v1138, %v1138
        %v1147 = vpack.c.bf16 %v1139, %v1139
        %v1148 = vpack.c.bf16 %v1140, %v1140
        %v1149 = vpack.c.bf16 %v1141, %v1141
        %v1150 = vpack.c.bf16 %v1142, %v1142
        %v1151 = vpack.c.bf16 %v1143, %v1143
        %v1152 = vpack.c.bf16 %v1144, %v1144
        %v1153 = vpack.c.bf16 %v716, %v716
        %v1154 = vpack.c.bf16 %v718, %v718
        %v1155 = vpack.c.bf16 %v733, %v733
        %v1156 = vpack.c.bf16 %v735, %v735
        %v1157 = vpack.c.bf16 %v750, %v750
        %v1158 = vpack.c.bf16 %v752, %v752
        %v1159 = vpack.c.bf16 %v767, %v767
        %v1160 = vpack.c.bf16 %v769, %v769
        %v1161 = vpack.c.bf16 %v784, %v784
        %v1162 = vpack.c.bf16 %v786, %v786
        %v1163 = vpack.c.bf16 %v801, %v801
        %v1164 = vpack.c.bf16 %v803, %v803
        %v1165 = vpack.c.bf16 %v818, %v818
        %v1166 = vpack.c.bf16 %v820, %v820
        %v1167 = vpack.c.bf16 %v835, %v835
        %v1168 = vpack.c.bf16 %v837, %v837
        %v1171 = vunpack.c.l.b16 %v1153
        %v1172 = vunpack.c.l.b16 %v1154
        %v1173 = vpack.c.b16 %v1172, %v1171
        %v1176 = vsel %vm1056, %v1145, 0
        %1178 = vmatpush.bf16.msra.mxu0 0
        %1179 = vmatpush.bf16.msra.mxu0 0
        %1180 = vmatpush.bf16.msra.mxu0 0
        %1181 = vmatpush.bf16.msra.mxu0 0
        %1182 = vmatpush.bf16.msra.mxu0 0
        %1183 = vmatpush.bf16.msra.mxu0 0
        %1184 = vmatpush.bf16.msra.mxu0 0
        %1185 = vmatpush.bf16.msra.mxu0 %v1173
        %1186 = vmatmul.bf16.gmra.mxu0 %v1176
        %v1187 = vpop.f32.mrf.mxu0
        %v1188 = vadd.f32 0.0, %v1187
        %v1189 = vpop.f32.mrf.mxu0
        %1190 = vdwg.mxu0
        %v1193 = vunpack.c.l.b16 %v1155
        %v1194 = vunpack.c.l.b16 %v1156
        %v1195 = vpack.c.b16 %v1194, %v1193
        %v1198 = vsel %vm1056, %v1146, 0
        %1200 = vmatpush.bf16.msra.mxu0 0
        %1201 = vmatpush.bf16.msra.mxu0 0
        %1202 = vmatpush.bf16.msra.mxu0 0
        %1203 = vmatpush.bf16.msra.mxu0 0
        %1204 = vmatpush.bf16.msra.mxu0 0
        %1205 = vmatpush.bf16.msra.mxu0 0
        %1206 = vmatpush.bf16.msra.mxu0 0
        %1207 = vmatpush.bf16.msra.mxu0 %v1195
        %1208 = vmatmul.bf16.gmra.mxu0 %v1198
        %v1209 = vpop.f32.mrf.mxu0
        %v1210 = vadd.f32 0.0, %v1209
        %v1211 = vpop.f32.mrf.mxu0
        %1212 = vdwg.mxu0
        %v1215 = vunpack.c.l.b16 %v1157
        %v1216 = vunpack.c.l.b16 %v1158
        %v1217 = vpack.c.b16 %v1216, %v1215
        %v1220 = vsel %vm1056, %v1147, 0
        %1222 = vmatpush.bf16.msra.mxu0 0
        %1223 = vmatpush.bf16.msra.mxu0 0
        %1224 = vmatpush.bf16.msra.mxu0 0
        %1225 = vmatpush.bf16.msra.mxu0 0
        %1226 = vmatpush.bf16.msra.mxu0 0
        %1227 = vmatpush.bf16.msra.mxu0 0
        %1228 = vmatpush.bf16.msra.mxu0 0
        %1229 = vmatpush.bf16.msra.mxu0 %v1217
        %1230 = vmatmul.bf16.gmra.mxu0 %v1220
        %v1231 = vpop.f32.mrf.mxu0
        %v1232 = vadd.f32 0.0, %v1231
        %v1233 = vpop.f32.mrf.mxu0
        %1234 = vdwg.mxu0
        %v1237 = vunpack.c.l.b16 %v1159
        %v1238 = vunpack.c.l.b16 %v1160
        %v1239 = vpack.c.b16 %v1238, %v1237
        %v1242 = vsel %vm1056, %v1148, 0
        %1244 = vmatpush.bf16.msra.mxu0 0
        %1245 = vmatpush.bf16.msra.mxu0 0
        %1246 = vmatpush.bf16.msra.mxu0 0
        %1247 = vmatpush.bf16.msra.mxu0 0
        %1248 = vmatpush.bf16.msra.mxu0 0
        %1249 = vmatpush.bf16.msra.mxu0 0
        %1250 = vmatpush.bf16.msra.mxu0 0
        %1251 = vmatpush.bf16.msra.mxu0 %v1239
        %1252 = vmatmul.bf16.gmra.mxu0 %v1242
        %v1253 = vpop.f32.mrf.mxu0
        %v1254 = vadd.f32 0.0, %v1253
        %v1255 = vpop.f32.mrf.mxu0
        %1256 = vdwg.mxu0
        %v1259 = vunpack.c.l.b16 %v1161
        %v1260 = vunpack.c.l.b16 %v1162
        %v1261 = vpack.c.b16 %v1260, %v1259
        %v1264 = vsel %vm1056, %v1149, 0
        %1266 = vmatpush.bf16.msra.mxu0 0
        %1267 = vmatpush.bf16.msra.mxu0 0
        %1268 = vmatpush.bf16.msra.mxu0 0
        %1269 = vmatpush.bf16.msra.mxu0 0
        %1270 = vmatpush.bf16.msra.mxu0 0
        %1271 = vmatpush.bf16.msra.mxu0 0
        %1272 = vmatpush.bf16.msra.mxu0 0
        %1273 = vmatpush.bf16.msra.mxu0 %v1261
        %1274 = vmatmul.bf16.gmra.mxu0 %v1264
        %v1275 = vpop.f32.mrf.mxu0
        %v1276 = vadd.f32 0.0, %v1275
        %v1277 = vpop.f32.mrf.mxu0
        %1278 = vdwg.mxu0
        %v1281 = vunpack.c.l.b16 %v1163
        %v1282 = vunpack.c.l.b16 %v1164
        %v1283 = vpack.c.b16 %v1282, %v1281
        %v1286 = vsel %vm1056, %v1150, 0
        %1288 = vmatpush.bf16.msra.mxu0 0
        %1289 = vmatpush.bf16.msra.mxu0 0
        %1290 = vmatpush.bf16.msra.mxu0 0
        %1291 = vmatpush.bf16.msra.mxu0 0
        %1292 = vmatpush.bf16.msra.mxu0 0
        %1293 = vmatpush.bf16.msra.mxu0 0
        %1294 = vmatpush.bf16.msra.mxu0 0
        %1295 = vmatpush.bf16.msra.mxu0 %v1283
        %1296 = vmatmul.bf16.gmra.mxu0 %v1286
        %v1297 = vpop.f32.mrf.mxu0
        %v1298 = vadd.f32 0.0, %v1297
        %v1299 = vpop.f32.mrf.mxu0
        %1300 = vdwg.mxu0
        %v1303 = vunpack.c.l.b16 %v1165
        %v1304 = vunpack.c.l.b16 %v1166
        %v1305 = vpack.c.b16 %v1304, %v1303
        %v1308 = vsel %vm1056, %v1151, 0
        %1310 = vmatpush.bf16.msra.mxu0 0
        %1311 = vmatpush.bf16.msra.mxu0 0
        %1312 = vmatpush.bf16.msra.mxu0 0
        %1313 = vmatpush.bf16.msra.mxu0 0
        %1314 = vmatpush.bf16.msra.mxu0 0
        %1315 = vmatpush.bf16.msra.mxu0 0
        %1316 = vmatpush.bf16.msra.mxu0 0
        %1317 = vmatpush.bf16.msra.mxu0 %v1305
        %1318 = vmatmul.bf16.gmra.mxu0 %v1308
        %v1319 = vpop.f32.mrf.mxu0
        %v1320 = vadd.f32 0.0, %v1319
        %v1321 = vpop.f32.mrf.mxu0
        %1322 = vdwg.mxu0
        %v1325 = vunpack.c.l.b16 %v1167
        %v1326 = vunpack.c.l.b16 %v1168
        %v1327 = vpack.c.b16 %v1326, %v1325
        %v1330 = vsel %vm1056, %v1152, 0
        %1332 = vmatpush.bf16.msra.mxu0 0
        %1333 = vmatpush.bf16.msra.mxu0 0
        %1334 = vmatpush.bf16.msra.mxu0 0
        %1335 = vmatpush.bf16.msra.mxu0 0
        %1336 = vmatpush.bf16.msra.mxu0 0
        %1337 = vmatpush.bf16.msra.mxu0 0
        %1338 = vmatpush.bf16.msra.mxu0 0
        %1339 = vmatpush.bf16.msra.mxu0 %v1327
        %1340 = vmatmul.bf16.gmra.mxu0 %v1330
        %v1341 = vpop.f32.mrf.mxu0
        %v1342 = vadd.f32 0.0, %v1341
        %v1343 = vpop.f32.mrf.mxu0
        %1344 = vdwg.mxu0
        %v1345 = vpack.c.bf16 %v1188, %v1188
        %v1346 = vpack.c.bf16 %v1210, %v1210
        %v1347 = vpack.c.bf16 %v1232, %v1232
        %v1348 = vpack.c.bf16 %v1254, %v1254
        %v1349 = vpack.c.bf16 %v1276, %v1276
        %v1350 = vpack.c.bf16 %v1298, %v1298
        %v1351 = vpack.c.bf16 %v1320, %v1320
        %v1352 = vpack.c.bf16 %v1342, %v1342
        %v1354 = vsel %vm868, %v1345, 0
        %vm1356 = vcmask 1041408
        %v1358 = vsel %vm1356, %v373, 0
        %1360 = vmatpush.bf16.msra.mxu0 0
        %1361 = vmatpush.bf16.msra.mxu0 0
        %1362 = vmatpush.bf16.msra.mxu0 0
        %1363 = vmatpush.bf16.msra.mxu0 0
        %1364 = vmatpush.bf16.msra.mxu0 0
        %1365 = vmatpush.bf16.msra.mxu0 0
        %1366 = vmatpush.bf16.msra.mxu0 0
        %1367 = vmatpush.bf16.msra.mxu0 %v1358
        %1368 = vmatmul.bf16.gmra.mxu0 %v1354
        %v1369 = vpop.f32.mrf.mxu0
        %v1370 = vadd.f32 0.0, %v1369
        %v1371 = vpop.f32.mrf.mxu0
        %1372 = vdwg.mxu0
        %v1374 = vsel %vm868, %v1346, 0
        %v1377 = vsel %vm1356, %v374, 0
        %1379 = vmatpush.bf16.msra.mxu0 0
        %1380 = vmatpush.bf16.msra.mxu0 0
        %1381 = vmatpush.bf16.msra.mxu0 0
        %1382 = vmatpush.bf16.msra.mxu0 0
        %1383 = vmatpush.bf16.msra.mxu0 0
        %1384 = vmatpush.bf16.msra.mxu0 0
        %1385 = vmatpush.bf16.msra.mxu0 0
        %1386 = vmatpush.bf16.msra.mxu0 %v1377
        %1387 = vmatmul.bf16.gmra.mxu0 %v1374
        %v1388 = vpop.f32.mrf.mxu0
        %v1389 = vadd.f32 0.0, %v1388
        %v1390 = vpop.f32.mrf.mxu0
        %1391 = vdwg.mxu0
        %v1393 = vsel %vm868, %v1347, 0
        %v1396 = vsel %vm1356, %v375, 0
        %1398 = vmatpush.bf16.msra.mxu0 0
        %1399 = vmatpush.bf16.msra.mxu0 0
        %1400 = vmatpush.bf16.msra.mxu0 0
        %1401 = vmatpush.bf16.msra.mxu0 0
        %1402 = vmatpush.bf16.msra.mxu0 0
        %1403 = vmatpush.bf16.msra.mxu0 0
        %1404 = vmatpush.bf16.msra.mxu0 0
        %1405 = vmatpush.bf16.msra.mxu0 %v1396
        %1406 = vmatmul.bf16.gmra.mxu0 %v1393
        %v1407 = vpop.f32.mrf.mxu0
        %v1408 = vadd.f32 0.0, %v1407
        %v1409 = vpop.f32.mrf.mxu0
        %1410 = vdwg.mxu0
        %v1412 = vsel %vm868, %v1348, 0
        %v1415 = vsel %vm1356, %v376, 0
        %1417 = vmatpush.bf16.msra.mxu0 0
        %1418 = vmatpush.bf16.msra.mxu0 0
        %1419 = vmatpush.bf16.msra.mxu0 0
        %1420 = vmatpush.bf16.msra.mxu0 0
        %1421 = vmatpush.bf16.msra.mxu0 0
        %1422 = vmatpush.bf16.msra.mxu0 0
        %1423 = vmatpush.bf16.msra.mxu0 0
        %1424 = vmatpush.bf16.msra.mxu0 %v1415
        %1425 = vmatmul.bf16.gmra.mxu0 %v1412
        %v1426 = vpop.f32.mrf.mxu0
        %v1427 = vadd.f32 0.0, %v1426
        %v1428 = vpop.f32.mrf.mxu0
        %1429 = vdwg.mxu0
        %v1431 = vsel %vm868, %v1349, 0
        %v1434 = vsel %vm1356, %v377, 0
        %1436 = vmatpush.bf16.msra.mxu0 0
        %1437 = vmatpush.bf16.msra.mxu0 0
        %1438 = vmatpush.bf16.msra.mxu0 0
        %1439 = vmatpush.bf16.msra.mxu0 0
        %1440 = vmatpush.bf16.msra.mxu0 0
        %1441 = vmatpush.bf16.msra.mxu0 0
        %1442 = vmatpush.bf16.msra.mxu0 0
        %1443 = vmatpush.bf16.msra.mxu0 %v1434
        %1444 = vmatmul.bf16.gmra.mxu0 %v1431
        %v1445 = vpop.f32.mrf.mxu0
        %v1446 = vadd.f32 0.0, %v1445
        %v1447 = vpop.f32.mrf.mxu0
        %1448 = vdwg.mxu0
        %v1450 = vsel %vm868, %v1350, 0
        %v1453 = vsel %vm1356, %v378, 0
        %1455 = vmatpush.bf16.msra.mxu0 0
        %1456 = vmatpush.bf16.msra.mxu0 0
        %1457 = vmatpush.bf16.msra.mxu0 0
        %1458 = vmatpush.bf16.msra.mxu0 0
        %1459 = vmatpush.bf16.msra.mxu0 0
        %1460 = vmatpush.bf16.msra.mxu0 0
        %1461 = vmatpush.bf16.msra.mxu0 0
        %1462 = vmatpush.bf16.msra.mxu0 %v1453
        %1463 = vmatmul.bf16.gmra.mxu0 %v1450
        %v1464 = vpop.f32.mrf.mxu0
        %v1465 = vadd.f32 0.0, %v1464
        %v1466 = vpop.f32.mrf.mxu0
        %1467 = vdwg.mxu0
        %v1469 = vsel %vm868, %v1351, 0
        %v1472 = vsel %vm1356, %v379, 0
        %1474 = vmatpush.bf16.msra.mxu0 0
        %1475 = vmatpush.bf16.msra.mxu0 0
        %1476 = vmatpush.bf16.msra.mxu0 0
        %1477 = vmatpush.bf16.msra.mxu0 0
        %1478 = vmatpush.bf16.msra.mxu0 0
        %1479 = vmatpush.bf16.msra.mxu0 0
        %1480 = vmatpush.bf16.msra.mxu0 0
        %1481 = vmatpush.bf16.msra.mxu0 %v1472
        %1482 = vmatmul.bf16.gmra.mxu0 %v1469
        %v1483 = vpop.f32.mrf.mxu0
        %v1484 = vadd.f32 0.0, %v1483
        %v1485 = vpop.f32.mrf.mxu0
        %1486 = vdwg.mxu0
        %v1488 = vsel %vm868, %v1352, 0
        %v1491 = vsel %vm1356, %v380, 0
        %1493 = vmatpush.bf16.msra.mxu0 0
        %1494 = vmatpush.bf16.msra.mxu0 0
        %1495 = vmatpush.bf16.msra.mxu0 0
        %1496 = vmatpush.bf16.msra.mxu0 0
        %1497 = vmatpush.bf16.msra.mxu0 0
        %1498 = vmatpush.bf16.msra.mxu0 0
        %1499 = vmatpush.bf16.msra.mxu0 0
        %1500 = vmatpush.bf16.msra.mxu0 %v1491
        %1501 = vmatmul.bf16.gmra.mxu0 %v1488
        %v1502 = vpop.f32.mrf.mxu0
        %v1503 = vadd.f32 0.0, %v1502
        %v1504 = vpop.f32.mrf.mxu0
        %1505 = vdwg.mxu0
        %v1506 = vsel %vm391, %v1370, 0.0
        %v1507 = vsel %vm391, %v1389, 0.0
        %v1508 = vadd.f32 %v1506, %v1507
        %v1509 = vsel %vm391, %v1408, 0.0
        %v1510 = vadd.f32 %v1508, %v1509
        %v1511 = vsel %vm391, %v1427, 0.0
        %v1512 = vadd.f32 %v1510, %v1511
        %v1513 = vsel %vm391, %v1446, 0.0
        %v1514 = vadd.f32 %v1512, %v1513
        %v1515 = vsel %vm391, %v1465, 0.0
        %v1516 = vadd.f32 %v1514, %v1515
        %v1517 = vsel %vm391, %v1484, 0.0
        %v1518 = vadd.f32 %v1516, %v1517
        %v1519 = vsel %vm391, %v1503, 0.0
        %v1520 = vadd.f32 %v1518, %v1519
        %v1521 = vperm.slane %v389, 6
        %v1522 = vadd.f32 %v1520, %v1521
        %v1523 = vadd.f32 %v322, %v1522
        %v1524 = vsel %vm391, %v1523, 0.0
        %1525 = vadd.xlane.f32.xlu0 %v1524
        %v1526 = vpop.xlane.xlu0 %1525
        %v1527 = vmul.f32 %v1526, %v401
        %v1528 = vsub.f32 %v1523, %v1527
        %v1529 = vmul.f32 %v1528, %v1528
        %v1530 = vsel %vm391, %v1529, 0.0
        %1531 = vadd.xlane.f32.xlu0 %v1530
        %v1532 = vpop.xlane.xlu0 %1531
        %v1533 = vmul.f32 %v1532, %v401
        %v1534 = vadd.f32 %v1533, 1e-05
        %v1535 = vrsqrt.pop %v1534
        %v1536 = vmul.f32 %v1535, %v1534
        %v1537 = vmul.f32 %v1536, %v1535
        %v1538 = vmul.f32 0.5, %v1537
        %v1539 = vsub.f32 1.5, %v1538
        %v1540 = vmul.f32 %v1535, %v1539
        %vm1541 = vweird.f32 %v1534
        %vm1542 = vweird.f32 %v1535
        %vm1543 = vmor %vm1541, %vm1542
        %v1544 = vsel %vm1543, %v1535, %v1540
        %v1545 = vmul.f32 %v1528, %v1544
        %v1546 = vperm.slane %v389, 2
        %v1547 = vmul.f32 %v1545, %v1546
        %v1548 = vperm.slane %v389, 3
        %v1549 = vadd.f32 %v1547, %v1548
        %v1550 = vpack.c.bf16 %v1549, %v1549
        %v1552 = vsel %vm391, %v1550, 0
        %v1555 = vsel %vm391, %v349, 0
        %1557 = vmatpush.bf16.xpose.msra.mxu0 0
        %1558 = vmatpush.bf16.xpose.msra.mxu0 0
        %1559 = vmatpush.bf16.xpose.msra.mxu0 0
        %1560 = vmatpush.bf16.xpose.msra.mxu0 0
        %1561 = vmatpush.bf16.xpose.msra.mxu0 0
        %1562 = vmatpush.bf16.xpose.msra.mxu0 0
        %1563 = vmatpush.bf16.xpose.msra.mxu0 0
        %1564 = vmatpush.bf16.xpose.msra.mxu0 %v1555
        %1565 = vmatmul.bf16.gmra.mxu0 %v1552
        %v1566 = vpop.f32.mrf.mxu0
        %v1567 = vadd.f32 0.0, %v1566
        %v1568 = vpop.f32.mrf.mxu0
        %1569 = vdwg.mxu0
        %v1571 = vsel %vm391, %v350, 0
        %1573 = vmatpush.bf16.xpose.msra.mxu0 0
        %1574 = vmatpush.bf16.xpose.msra.mxu0 0
        %1575 = vmatpush.bf16.xpose.msra.mxu0 0
        %1576 = vmatpush.bf16.xpose.msra.mxu0 0
        %1577 = vmatpush.bf16.xpose.msra.mxu0 0
        %1578 = vmatpush.bf16.xpose.msra.mxu0 0
        %1579 = vmatpush.bf16.xpose.msra.mxu0 0
        %1580 = vmatpush.bf16.xpose.msra.mxu0 %v1571
        %1581 = vmatmul.bf16.gmra.mxu0 %v1552
        %v1582 = vpop.f32.mrf.mxu0
        %v1583 = vadd.f32 0.0, %v1582
        %v1584 = vpop.f32.mrf.mxu0
        %1585 = vdwg.mxu0
        %v1587 = vsel %vm391, %v351, 0
        %1589 = vmatpush.bf16.xpose.msra.mxu0 0
        %1590 = vmatpush.bf16.xpose.msra.mxu0 0
        %1591 = vmatpush.bf16.xpose.msra.mxu0 0
        %1592 = vmatpush.bf16.xpose.msra.mxu0 0
        %1593 = vmatpush.bf16.xpose.msra.mxu0 0
        %1594 = vmatpush.bf16.xpose.msra.mxu0 0
        %1595 = vmatpush.bf16.xpose.msra.mxu0 0
        %1596 = vmatpush.bf16.xpose.msra.mxu0 %v1587
        %1597 = vmatmul.bf16.gmra.mxu0 %v1552
        %v1598 = vpop.f32.mrf.mxu0
        %v1599 = vadd.f32 0.0, %v1598
        %v1600 = vpop.f32.mrf.mxu0
        %1601 = vdwg.mxu0
        %v1603 = vsel %vm391, %v352, 0
        %1605 = vmatpush.bf16.xpose.msra.mxu0 0
        %1606 = vmatpush.bf16.xpose.msra.mxu0 0
        %1607 = vmatpush.bf16.xpose.msra.mxu0 0
        %1608 = vmatpush.bf16.xpose.msra.mxu0 0
        %1609 = vmatpush.bf16.xpose.msra.mxu0 0
        %1610 = vmatpush.bf16.xpose.msra.mxu0 0
        %1611 = vmatpush.bf16.xpose.msra.mxu0 0
        %1612 = vmatpush.bf16.xpose.msra.mxu0 %v1603
        %1613 = vmatmul.bf16.gmra.mxu0 %v1552
        %v1614 = vpop.f32.mrf.mxu0
        %v1615 = vadd.f32 0.0, %v1614
        %v1616 = vpop.f32.mrf.mxu0
        %1617 = vdwg.mxu0
        %v1619 = vsel %vm391, %v353, 0
        %1621 = vmatpush.bf16.xpose.msra.mxu0 0
        %1622 = vmatpush.bf16.xpose.msra.mxu0 0
        %1623 = vmatpush.bf16.xpose.msra.mxu0 0
        %1624 = vmatpush.bf16.xpose.msra.mxu0 0
        %1625 = vmatpush.bf16.xpose.msra.mxu0 0
        %1626 = vmatpush.bf16.xpose.msra.mxu0 0
        %1627 = vmatpush.bf16.xpose.msra.mxu0 0
        %1628 = vmatpush.bf16.xpose.msra.mxu0 %v1619
        %1629 = vmatmul.bf16.gmra.mxu0 %v1552
        %v1630 = vpop.f32.mrf.mxu0
        %v1631 = vadd.f32 0.0, %v1630
        %v1632 = vpop.f32.mrf.mxu0
        %1633 = vdwg.mxu0
        %v1635 = vsel %vm391, %v354, 0
        %1637 = vmatpush.bf16.xpose.msra.mxu0 0
        %1638 = vmatpush.bf16.xpose.msra.mxu0 0
        %1639 = vmatpush.bf16.xpose.msra.mxu0 0
        %1640 = vmatpush.bf16.xpose.msra.mxu0 0
        %1641 = vmatpush.bf16.xpose.msra.mxu0 0
        %1642 = vmatpush.bf16.xpose.msra.mxu0 0
        %1643 = vmatpush.bf16.xpose.msra.mxu0 0
        %1644 = vmatpush.bf16.xpose.msra.mxu0 %v1635
        %1645 = vmatmul.bf16.gmra.mxu0 %v1552
        %v1646 = vpop.f32.mrf.mxu0
        %v1647 = vadd.f32 0.0, %v1646
        %v1648 = vpop.f32.mrf.mxu0
        %1649 = vdwg.mxu0
        %v1651 = vsel %vm391, %v355, 0
        %1653 = vmatpush.bf16.xpose.msra.mxu0 0
        %1654 = vmatpush.bf16.xpose.msra.mxu0 0
        %1655 = vmatpush.bf16.xpose.msra.mxu0 0
        %1656 = vmatpush.bf16.xpose.msra.mxu0 0
        %1657 = vmatpush.bf16.xpose.msra.mxu0 0
        %1658 = vmatpush.bf16.xpose.msra.mxu0 0
        %1659 = vmatpush.bf16.xpose.msra.mxu0 0
        %1660 = vmatpush.bf16.xpose.msra.mxu0 %v1651
        %1661 = vmatmul.bf16.gmra.mxu0 %v1552
        %v1662 = vpop.f32.mrf.mxu0
        %v1663 = vadd.f32 0.0, %v1662
        %v1664 = vpop.f32.mrf.mxu0
        %1665 = vdwg.mxu0
        %v1667 = vsel %vm391, %v356, 0
        %1669 = vmatpush.bf16.xpose.msra.mxu0 0
        %1670 = vmatpush.bf16.xpose.msra.mxu0 0
        %1671 = vmatpush.bf16.xpose.msra.mxu0 0
        %1672 = vmatpush.bf16.xpose.msra.mxu0 0
        %1673 = vmatpush.bf16.xpose.msra.mxu0 0
        %1674 = vmatpush.bf16.xpose.msra.mxu0 0
        %1675 = vmatpush.bf16.xpose.msra.mxu0 0
        %1676 = vmatpush.bf16.xpose.msra.mxu0 %v1667
        %1677 = vmatmul.bf16.gmra.mxu0 %v1552
        %v1678 = vpop.f32.mrf.mxu0
        %v1679 = vadd.f32 0.0, %v1678
        %v1680 = vpop.f32.mrf.mxu0
        %1681 = vdwg.mxu0
        %v1683 = vsel %vm391, %v357, 0
        %1685 = vmatpush.bf16.xpose.msra.mxu0 0
        %1686 = vmatpush.bf16.xpose.msra.mxu0 0
        %1687 = vmatpush.bf16.xpose.msra.mxu0 0
        %1688 = vmatpush.bf16.xpose.msra.mxu0 0
        %1689 = vmatpush.bf16.xpose.msra.mxu0 0
        %1690 = vmatpush.bf16.xpose.msra.mxu0 0
        %1691 = vmatpush.bf16.xpose.msra.mxu0 0
        %1692 = vmatpush.bf16.xpose.msra.mxu0 %v1683
        %1693 = vmatmul.bf16.gmra.mxu0 %v1552
        %v1694 = vpop.f32.mrf.mxu0
        %v1695 = vadd.f32 0.0, %v1694
        %v1696 = vpop.f32.mrf.mxu0
        %1697 = vdwg.mxu0
        %v1699 = vsel %vm391, %v358, 0
        %1701 = vmatpush.bf16.xpose.msra.mxu0 0
        %1702 = vmatpush.bf16.xpose.msra.mxu0 0
        %1703 = vmatpush.bf16.xpose.msra.mxu0 0
        %1704 = vmatpush.bf16.xpose.msra.mxu0 0
        %1705 = vmatpush.bf16.xpose.msra.mxu0 0
        %1706 = vmatpush.bf16.xpose.msra.mxu0 0
        %1707 = vmatpush.bf16.xpose.msra.mxu0 0
        %1708 = vmatpush.bf16.xpose.msra.mxu0 %v1699
        %1709 = vmatmul.bf16.gmra.mxu0 %v1552
        %v1710 = vpop.f32.mrf.mxu0
        %v1711 = vadd.f32 0.0, %v1710
        %v1712 = vpop.f32.mrf.mxu0
        %1713 = vdwg.mxu0
        %v1715 = vsel %vm391, %v359, 0
        %1717 = vmatpush.bf16.xpose.msra.mxu0 0
        %1718 = vmatpush.bf16.xpose.msra.mxu0 0
        %1719 = vmatpush.bf16.xpose.msra.mxu0 0
        %1720 = vmatpush.bf16.xpose.msra.mxu0 0
        %1721 = vmatpush.bf16.xpose.msra.mxu0 0
        %1722 = vmatpush.bf16.xpose.msra.mxu0 0
        %1723 = vmatpush.bf16.xpose.msra.mxu0 0
        %1724 = vmatpush.bf16.xpose.msra.mxu0 %v1715
        %1725 = vmatmul.bf16.gmra.mxu0 %v1552
        %v1726 = vpop.f32.mrf.mxu0
        %v1727 = vadd.f32 0.0, %v1726
        %v1728 = vpop.f32.mrf.mxu0
        %1729 = vdwg.mxu0
        %v1731 = vsel %vm391, %v360, 0
        %1733 = vmatpush.bf16.xpose.msra.mxu0 0
        %1734 = vmatpush.bf16.xpose.msra.mxu0 0
        %1735 = vmatpush.bf16.xpose.msra.mxu0 0
        %1736 = vmatpush.bf16.xpose.msra.mxu0 0
        %1737 = vmatpush.bf16.xpose.msra.mxu0 0
        %1738 = vmatpush.bf16.xpose.msra.mxu0 0
        %1739 = vmatpush.bf16.xpose.msra.mxu0 0
        %1740 = vmatpush.bf16.xpose.msra.mxu0 %v1731
        %1741 = vmatmul.bf16.gmra.mxu0 %v1552
        %v1742 = vpop.f32.mrf.mxu0
        %v1743 = vadd.f32 0.0, %v1742
        %v1744 = vpop.f32.mrf.mxu0
        %1745 = vdwg.mxu0
        %v1747 = vsel %vm391, %v361, 0
        %1749 = vmatpush.bf16.xpose.msra.mxu0 0
        %1750 = vmatpush.bf16.xpose.msra.mxu0 0
        %1751 = vmatpush.bf16.xpose.msra.mxu0 0
        %1752 = vmatpush.bf16.xpose.msra.mxu0 0
        %1753 = vmatpush.bf16.xpose.msra.mxu0 0
        %1754 = vmatpush.bf16.xpose.msra.mxu0 0
        %1755 = vmatpush.bf16.xpose.msra.mxu0 0
        %1756 = vmatpush.bf16.xpose.msra.mxu0 %v1747
        %1757 = vmatmul.bf16.gmra.mxu0 %v1552
        %v1758 = vpop.f32.mrf.mxu0
        %v1759 = vadd.f32 0.0, %v1758
        %v1760 = vpop.f32.mrf.mxu0
        %1761 = vdwg.mxu0
        %v1763 = vsel %vm391, %v362, 0
        %1765 = vmatpush.bf16.xpose.msra.mxu0 0
        %1766 = vmatpush.bf16.xpose.msra.mxu0 0
        %1767 = vmatpush.bf16.xpose.msra.mxu0 0
        %1768 = vmatpush.bf16.xpose.msra.mxu0 0
        %1769 = vmatpush.bf16.xpose.msra.mxu0 0
        %1770 = vmatpush.bf16.xpose.msra.mxu0 0
        %1771 = vmatpush.bf16.xpose.msra.mxu0 0
        %1772 = vmatpush.bf16.xpose.msra.mxu0 %v1763
        %1773 = vmatmul.bf16.gmra.mxu0 %v1552
        %v1774 = vpop.f32.mrf.mxu0
        %v1775 = vadd.f32 0.0, %v1774
        %v1776 = vpop.f32.mrf.mxu0
        %1777 = vdwg.mxu0
        %v1779 = vsel %vm391, %v363, 0
        %1781 = vmatpush.bf16.xpose.msra.mxu0 0
        %1782 = vmatpush.bf16.xpose.msra.mxu0 0
        %1783 = vmatpush.bf16.xpose.msra.mxu0 0
        %1784 = vmatpush.bf16.xpose.msra.mxu0 0
        %1785 = vmatpush.bf16.xpose.msra.mxu0 0
        %1786 = vmatpush.bf16.xpose.msra.mxu0 0
        %1787 = vmatpush.bf16.xpose.msra.mxu0 0
        %1788 = vmatpush.bf16.xpose.msra.mxu0 %v1779
        %1789 = vmatmul.bf16.gmra.mxu0 %v1552
        %v1790 = vpop.f32.mrf.mxu0
        %v1791 = vadd.f32 0.0, %v1790
        %v1792 = vpop.f32.mrf.mxu0
        %1793 = vdwg.mxu0
        %v1795 = vsel %vm391, %v364, 0
        %1797 = vmatpush.bf16.xpose.msra.mxu0 0
        %1798 = vmatpush.bf16.xpose.msra.mxu0 0
        %1799 = vmatpush.bf16.xpose.msra.mxu0 0
        %1800 = vmatpush.bf16.xpose.msra.mxu0 0
        %1801 = vmatpush.bf16.xpose.msra.mxu0 0
        %1802 = vmatpush.bf16.xpose.msra.mxu0 0
        %1803 = vmatpush.bf16.xpose.msra.mxu0 0
        %1804 = vmatpush.bf16.xpose.msra.mxu0 %v1795
        %1805 = vmatmul.bf16.gmra.mxu0 %v1552
        %v1806 = vpop.f32.mrf.mxu0
        %v1807 = vadd.f32 0.0, %v1806
        %v1808 = vpop.f32.mrf.mxu0
        %1809 = vdwg.mxu0
        %v1811 = vsel %vm391, %v365, 0
        %1813 = vmatpush.bf16.xpose.msra.mxu0 0
        %1814 = vmatpush.bf16.xpose.msra.mxu0 0
        %1815 = vmatpush.bf16.xpose.msra.mxu0 0
        %1816 = vmatpush.bf16.xpose.msra.mxu0 0
        %1817 = vmatpush.bf16.xpose.msra.mxu0 0
        %1818 = vmatpush.bf16.xpose.msra.mxu0 0
        %1819 = vmatpush.bf16.xpose.msra.mxu0 0
        %1820 = vmatpush.bf16.xpose.msra.mxu0 %v1811
        %1821 = vmatmul.bf16.gmra.mxu0 %v1552
        %v1822 = vpop.f32.mrf.mxu0
        %v1823 = vadd.f32 0.0, %v1822
        %v1824 = vpop.f32.mrf.mxu0
        %1825 = vdwg.mxu0
        %v1827 = vsel %vm391, %v366, 0
        %1829 = vmatpush.bf16.xpose.msra.mxu0 0
        %1830 = vmatpush.bf16.xpose.msra.mxu0 0
        %1831 = vmatpush.bf16.xpose.msra.mxu0 0
        %1832 = vmatpush.bf16.xpose.msra.mxu0 0
        %1833 = vmatpush.bf16.xpose.msra.mxu0 0
        %1834 = vmatpush.bf16.xpose.msra.mxu0 0
        %1835 = vmatpush.bf16.xpose.msra.mxu0 0
        %1836 = vmatpush.bf16.xpose.msra.mxu0 %v1827
        %1837 = vmatmul.bf16.gmra.mxu0 %v1552
        %v1838 = vpop.f32.mrf.mxu0
        %v1839 = vadd.f32 0.0, %v1838
        %v1840 = vpop.f32.mrf.mxu0
        %1841 = vdwg.mxu0
        %v1843 = vsel %vm391, %v367, 0
        %1845 = vmatpush.bf16.xpose.msra.mxu0 0
        %1846 = vmatpush.bf16.xpose.msra.mxu0 0
        %1847 = vmatpush.bf16.xpose.msra.mxu0 0
        %1848 = vmatpush.bf16.xpose.msra.mxu0 0
        %1849 = vmatpush.bf16.xpose.msra.mxu0 0
        %1850 = vmatpush.bf16.xpose.msra.mxu0 0
        %1851 = vmatpush.bf16.xpose.msra.mxu0 0
        %1852 = vmatpush.bf16.xpose.msra.mxu0 %v1843
        %1853 = vmatmul.bf16.gmra.mxu0 %v1552
        %v1854 = vpop.f32.mrf.mxu0
        %v1855 = vadd.f32 0.0, %v1854
        %v1856 = vpop.f32.mrf.mxu0
        %1857 = vdwg.mxu0
        %v1859 = vsel %vm391, %v368, 0
        %1861 = vmatpush.bf16.xpose.msra.mxu0 0
        %1862 = vmatpush.bf16.xpose.msra.mxu0 0
        %1863 = vmatpush.bf16.xpose.msra.mxu0 0
        %1864 = vmatpush.bf16.xpose.msra.mxu0 0
        %1865 = vmatpush.bf16.xpose.msra.mxu0 0
        %1866 = vmatpush.bf16.xpose.msra.mxu0 0
        %1867 = vmatpush.bf16.xpose.msra.mxu0 0
        %1868 = vmatpush.bf16.xpose.msra.mxu0 %v1859
        %1869 = vmatmul.bf16.gmra.mxu0 %v1552
        %v1870 = vpop.f32.mrf.mxu0
        %v1871 = vadd.f32 0.0, %v1870
        %v1872 = vpop.f32.mrf.mxu0
        %1873 = vdwg.mxu0
        %v1875 = vsel %vm391, %v369, 0
        %1877 = vmatpush.bf16.xpose.msra.mxu0 0
        %1878 = vmatpush.bf16.xpose.msra.mxu0 0
        %1879 = vmatpush.bf16.xpose.msra.mxu0 0
        %1880 = vmatpush.bf16.xpose.msra.mxu0 0
        %1881 = vmatpush.bf16.xpose.msra.mxu0 0
        %1882 = vmatpush.bf16.xpose.msra.mxu0 0
        %1883 = vmatpush.bf16.xpose.msra.mxu0 0
        %1884 = vmatpush.bf16.xpose.msra.mxu0 %v1875
        %1885 = vmatmul.bf16.gmra.mxu0 %v1552
        %v1886 = vpop.f32.mrf.mxu0
        %v1887 = vadd.f32 0.0, %v1886
        %v1888 = vpop.f32.mrf.mxu0
        %1889 = vdwg.mxu0
        %v1891 = vsel %vm391, %v370, 0
        %1893 = vmatpush.bf16.xpose.msra.mxu0 0
        %1894 = vmatpush.bf16.xpose.msra.mxu0 0
        %1895 = vmatpush.bf16.xpose.msra.mxu0 0
        %1896 = vmatpush.bf16.xpose.msra.mxu0 0
        %1897 = vmatpush.bf16.xpose.msra.mxu0 0
        %1898 = vmatpush.bf16.xpose.msra.mxu0 0
        %1899 = vmatpush.bf16.xpose.msra.mxu0 0
        %1900 = vmatpush.bf16.xpose.msra.mxu0 %v1891
        %1901 = vmatmul.bf16.gmra.mxu0 %v1552
        %v1902 = vpop.f32.mrf.mxu0
        %v1903 = vadd.f32 0.0, %v1902
        %v1904 = vpop.f32.mrf.mxu0
        %1905 = vdwg.mxu0
        %v1907 = vsel %vm391, %v371, 0
        %1909 = vmatpush.bf16.xpose.msra.mxu0 0
        %1910 = vmatpush.bf16.xpose.msra.mxu0 0
        %1911 = vmatpush.bf16.xpose.msra.mxu0 0
        %1912 = vmatpush.bf16.xpose.msra.mxu0 0
        %1913 = vmatpush.bf16.xpose.msra.mxu0 0
        %1914 = vmatpush.bf16.xpose.msra.mxu0 0
        %1915 = vmatpush.bf16.xpose.msra.mxu0 0
        %1916 = vmatpush.bf16.xpose.msra.mxu0 %v1907
        %1917 = vmatmul.bf16.gmra.mxu0 %v1552
        %v1918 = vpop.f32.mrf.mxu0
        %v1919 = vadd.f32 0.0, %v1918
        %v1920 = vpop.f32.mrf.mxu0
        %1921 = vdwg.mxu0
        %v1923 = vsel %vm391, %v372, 0
        %1925 = vmatpush.bf16.xpose.msra.mxu0 0
        %1926 = vmatpush.bf16.xpose.msra.mxu0 0
        %1927 = vmatpush.bf16.xpose.msra.mxu0 0
        %1928 = vmatpush.bf16.xpose.msra.mxu0 0
        %1929 = vmatpush.bf16.xpose.msra.mxu0 0
        %1930 = vmatpush.bf16.xpose.msra.mxu0 0
        %1931 = vmatpush.bf16.xpose.msra.mxu0 0
        %1932 = vmatpush.bf16.xpose.msra.mxu0 %v1923
        %1933 = vmatmul.bf16.gmra.mxu0 %v1552
        %v1934 = vpop.f32.mrf.mxu0
        %v1935 = vadd.f32 0.0, %v1934
        %v1936 = vpop.f32.mrf.mxu0
        %1937 = vdwg.mxu0
        %v1938 = vpack.c.bf16 %v1567, %v1567
        %v1939 = vpack.c.bf16 %v1583, %v1583
        %v1940 = vpack.c.bf16 %v1599, %v1599
        %v1941 = vpack.c.bf16 %v1615, %v1615
        %v1942 = vpack.c.bf16 %v1631, %v1631
        %v1943 = vpack.c.bf16 %v1647, %v1647
        %v1944 = vpack.c.bf16 %v1663, %v1663
        %v1945 = vpack.c.bf16 %v1679, %v1679
        %v1946 = vpack.c.bf16 %v1695, %v1695
        %v1947 = vpack.c.bf16 %v1711, %v1711
        %v1948 = vpack.c.bf16 %v1727, %v1727
        %v1949 = vpack.c.bf16 %v1743, %v1743
        %v1950 = vpack.c.bf16 %v1759, %v1759
        %v1951 = vpack.c.bf16 %v1775, %v1775
        %v1952 = vpack.c.bf16 %v1791, %v1791
        %v1953 = vpack.c.bf16 %v1807, %v1807
        %v1955 = vsel %vm868, %v1938, 0
        %v1958 = vsel %vm868, %v1946, 0
        %1960 = vmatpush.bf16.xpose.msra.mxu0 0
        %1961 = vmatpush.bf16.xpose.msra.mxu0 0
        %1962 = vmatpush.bf16.xpose.msra.mxu0 0
        %1963 = vmatpush.bf16.xpose.msra.mxu0 0
        %1964 = vmatpush.bf16.xpose.msra.mxu0 0
        %1965 = vmatpush.bf16.xpose.msra.mxu0 0
        %1966 = vmatpush.bf16.xpose.msra.mxu0 0
        %1967 = vmatpush.bf16.xpose.msra.mxu0 %v1958
        %1968 = vmatmul.bf16.gmra.mxu0 %v1955
        %v1969 = vpop.f32.mrf.mxu0
        %v1970 = vadd.f32 0.0, %v1969
        %v1971 = vpop.f32.mrf.mxu0
        %1972 = vdwg.mxu0
        %v1974 = vsel %vm868, %v1939, 0
        %v1977 = vsel %vm868, %v1947, 0
        %1979 = vmatpush.bf16.xpose.msra.mxu0 0
        %1980 = vmatpush.bf16.xpose.msra.mxu0 0
        %1981 = vmatpush.bf16.xpose.msra.mxu0 0
        %1982 = vmatpush.bf16.xpose.msra.mxu0 0
        %1983 = vmatpush.bf16.xpose.msra.mxu0 0
        %1984 = vmatpush.bf16.xpose.msra.mxu0 0
        %1985 = vmatpush.bf16.xpose.msra.mxu0 0
        %1986 = vmatpush.bf16.xpose.msra.mxu0 %v1977
        %1987 = vmatmul.bf16.gmra.mxu0 %v1974
        %v1988 = vpop.f32.mrf.mxu0
        %v1989 = vadd.f32 0.0, %v1988
        %v1990 = vpop.f32.mrf.mxu0
        %1991 = vdwg.mxu0
        %v1993 = vsel %vm868, %v1940, 0
        %v1996 = vsel %vm868, %v1948, 0
        %1998 = vmatpush.bf16.xpose.msra.mxu0 0
        %1999 = vmatpush.bf16.xpose.msra.mxu0 0
        %2000 = vmatpush.bf16.xpose.msra.mxu0 0
        %2001 = vmatpush.bf16.xpose.msra.mxu0 0
        %2002 = vmatpush.bf16.xpose.msra.mxu0 0
        %2003 = vmatpush.bf16.xpose.msra.mxu0 0
        %2004 = vmatpush.bf16.xpose.msra.mxu0 0
        %2005 = vmatpush.bf16.xpose.msra.mxu0 %v1996
        %2006 = vmatmul.bf16.gmra.mxu0 %v1993
        %v2007 = vpop.f32.mrf.mxu0
        %v2008 = vadd.f32 0.0, %v2007
        %v2009 = vpop.f32.mrf.mxu0
        %2010 = vdwg.mxu0
        %v2012 = vsel %vm868, %v1941, 0
        %v2015 = vsel %vm868, %v1949, 0
        %2017 = vmatpush.bf16.xpose.msra.mxu0 0
        %2018 = vmatpush.bf16.xpose.msra.mxu0 0
        %2019 = vmatpush.bf16.xpose.msra.mxu0 0
        %2020 = vmatpush.bf16.xpose.msra.mxu0 0
        %2021 = vmatpush.bf16.xpose.msra.mxu0 0
        %2022 = vmatpush.bf16.xpose.msra.mxu0 0
        %2023 = vmatpush.bf16.xpose.msra.mxu0 0
        %2024 = vmatpush.bf16.xpose.msra.mxu0 %v2015
        %2025 = vmatmul.bf16.gmra.mxu0 %v2012
        %v2026 = vpop.f32.mrf.mxu0
        %v2027 = vadd.f32 0.0, %v2026
        %v2028 = vpop.f32.mrf.mxu0
        %2029 = vdwg.mxu0
        %v2031 = vsel %vm868, %v1942, 0
        %v2034 = vsel %vm868, %v1950, 0
        %2036 = vmatpush.bf16.xpose.msra.mxu0 0
        %2037 = vmatpush.bf16.xpose.msra.mxu0 0
        %2038 = vmatpush.bf16.xpose.msra.mxu0 0
        %2039 = vmatpush.bf16.xpose.msra.mxu0 0
        %2040 = vmatpush.bf16.xpose.msra.mxu0 0
        %2041 = vmatpush.bf16.xpose.msra.mxu0 0
        %2042 = vmatpush.bf16.xpose.msra.mxu0 0
        %2043 = vmatpush.bf16.xpose.msra.mxu0 %v2034
        %2044 = vmatmul.bf16.gmra.mxu0 %v2031
        %v2045 = vpop.f32.mrf.mxu0
        %v2046 = vadd.f32 0.0, %v2045
        %v2047 = vpop.f32.mrf.mxu0
        %2048 = vdwg.mxu0
        %v2050 = vsel %vm868, %v1943, 0
        %v2053 = vsel %vm868, %v1951, 0
        %2055 = vmatpush.bf16.xpose.msra.mxu0 0
        %2056 = vmatpush.bf16.xpose.msra.mxu0 0
        %2057 = vmatpush.bf16.xpose.msra.mxu0 0
        %2058 = vmatpush.bf16.xpose.msra.mxu0 0
        %2059 = vmatpush.bf16.xpose.msra.mxu0 0
        %2060 = vmatpush.bf16.xpose.msra.mxu0 0
        %2061 = vmatpush.bf16.xpose.msra.mxu0 0
        %2062 = vmatpush.bf16.xpose.msra.mxu0 %v2053
        %2063 = vmatmul.bf16.gmra.mxu0 %v2050
        %v2064 = vpop.f32.mrf.mxu0
        %v2065 = vadd.f32 0.0, %v2064
        %v2066 = vpop.f32.mrf.mxu0
        %2067 = vdwg.mxu0
        %v2069 = vsel %vm868, %v1944, 0
        %v2072 = vsel %vm868, %v1952, 0
        %2074 = vmatpush.bf16.xpose.msra.mxu0 0
        %2075 = vmatpush.bf16.xpose.msra.mxu0 0
        %2076 = vmatpush.bf16.xpose.msra.mxu0 0
        %2077 = vmatpush.bf16.xpose.msra.mxu0 0
        %2078 = vmatpush.bf16.xpose.msra.mxu0 0
        %2079 = vmatpush.bf16.xpose.msra.mxu0 0
        %2080 = vmatpush.bf16.xpose.msra.mxu0 0
        %2081 = vmatpush.bf16.xpose.msra.mxu0 %v2072
        %2082 = vmatmul.bf16.gmra.mxu0 %v2069
        %v2083 = vpop.f32.mrf.mxu0
        %v2084 = vadd.f32 0.0, %v2083
        %v2085 = vpop.f32.mrf.mxu0
        %2086 = vdwg.mxu0
        %v2088 = vsel %vm868, %v1945, 0
        %v2091 = vsel %vm868, %v1953, 0
        %2093 = vmatpush.bf16.xpose.msra.mxu0 0
        %2094 = vmatpush.bf16.xpose.msra.mxu0 0
        %2095 = vmatpush.bf16.xpose.msra.mxu0 0
        %2096 = vmatpush.bf16.xpose.msra.mxu0 0
        %2097 = vmatpush.bf16.xpose.msra.mxu0 0
        %2098 = vmatpush.bf16.xpose.msra.mxu0 0
        %2099 = vmatpush.bf16.xpose.msra.mxu0 0
        %2100 = vmatpush.bf16.xpose.msra.mxu0 %v2091
        %2101 = vmatmul.bf16.gmra.mxu0 %v2088
        %v2102 = vpop.f32.mrf.mxu0
        %v2103 = vadd.f32 0.0, %v2102
        %v2104 = vpop.f32.mrf.mxu0
        %2105 = vdwg.mxu0
        %vm2106 = vcmask 64512
        %v2107 = vsel %vm2106, %v1970, -inf
        %2108 = vmax.xlane.f32.xlu0 %v2107
        %v2109 = vpop.xlane.xlu0 %2108
        %v2110 = vsel %vm2106, %v1989, -inf
        %2111 = vmax.xlane.f32.xlu0 %v2110
        %v2112 = vpop.xlane.xlu0 %2111
        %v2113 = vsel %vm2106, %v2008, -inf
        %2114 = vmax.xlane.f32.xlu0 %v2113
        %v2115 = vpop.xlane.xlu0 %2114
        %v2116 = vsel %vm2106, %v2027, -inf
        %2117 = vmax.xlane.f32.xlu0 %v2116
        %v2118 = vpop.xlane.xlu0 %2117
        %v2119 = vsel %vm2106, %v2046, -inf
        %2120 = vmax.xlane.f32.xlu0 %v2119
        %v2121 = vpop.xlane.xlu0 %2120
        %v2122 = vsel %vm2106, %v2065, -inf
        %2123 = vmax.xlane.f32.xlu0 %v2122
        %v2124 = vpop.xlane.xlu0 %2123
        %v2125 = vsel %vm2106, %v2084, -inf
        %2126 = vmax.xlane.f32.xlu0 %v2125
        %v2127 = vpop.xlane.xlu0 %2126
        %v2128 = vsel %vm2106, %v2103, -inf
        %2129 = vmax.xlane.f32.xlu0 %v2128
        %v2130 = vpop.xlane.xlu0 %2129
        %v2131 = vsub.f32 %v1970, %v2109
        %v2132 = vsub.f32 %v1989, %v2112
        %v2133 = vsub.f32 %v2008, %v2115
        %v2134 = vsub.f32 %v2027, %v2118
        %v2135 = vsub.f32 %v2046, %v2121
        %v2136 = vsub.f32 %v2065, %v2124
        %v2137 = vsub.f32 %v2084, %v2127
        %v2138 = vsub.f32 %v2103, %v2130
        %v2139 = vmul.f32 %v2131, 1.442695
        %v2140 = vpow.pop %v2139
        %v2141 = vmul.f32 %v2132, 1.442695
        %v2142 = vpow.pop %v2141
        %v2143 = vmul.f32 %v2133, 1.442695
        %v2144 = vpow.pop %v2143
        %v2145 = vmul.f32 %v2134, 1.442695
        %v2146 = vpow.pop %v2145
        %v2147 = vmul.f32 %v2135, 1.442695
        %v2148 = vpow.pop %v2147
        %v2149 = vmul.f32 %v2136, 1.442695
        %v2150 = vpow.pop %v2149
        %v2151 = vmul.f32 %v2137, 1.442695
        %v2152 = vpow.pop %v2151
        %v2153 = vmul.f32 %v2138, 1.442695
        %v2154 = vpow.pop %v2153
        %v2155 = vsel %vm2106, %v2140, 0.0
        %2156 = vadd.xlane.f32.xlu0 %v2155
        %v2157 = vpop.xlane.xlu0 %2156
        %v2158 = vsel %vm2106, %v2142, 0.0
        %2159 = vadd.xlane.f32.xlu0 %v2158
        %v2160 = vpop.xlane.xlu0 %2159
        %v2161 = vsel %vm2106, %v2144, 0.0
        %2162 = vadd.xlane.f32.xlu0 %v2161
        %v2163 = vpop.xlane.xlu0 %2162
        %v2164 = vsel %vm2106, %v2146, 0.0
        %2165 = vadd.xlane.f32.xlu0 %v2164
        %v2166 = vpop.xlane.xlu0 %2165
        %v2167 = vsel %vm2106, %v2148, 0.0
        %2168 = vadd.xlane.f32.xlu0 %v2167
        %v2169 = vpop.xlane.xlu0 %2168
        %v2170 = vsel %vm2106, %v2150, 0.0
        %2171 = vadd.xlane.f32.xlu0 %v2170
        %v2172 = vpop.xlane.xlu0 %2171
        %v2173 = vsel %vm2106, %v2152, 0.0
        %2174 = vadd.xlane.f32.xlu0 %v2173
        %v2175 = vpop.xlane.xlu0 %2174
        %v2176 = vsel %vm2106, %v2154, 0.0
        %2177 = vadd.xlane.f32.xlu0 %v2176
        %v2178 = vpop.xlane.xlu0 %2177
        %v2179 = vrcp.pop %v2157
        %v2180 = vrcp.pop %v2160
        %v2181 = vrcp.pop %v2163
        %v2182 = vrcp.pop %v2166
        %v2183 = vrcp.pop %v2169
        %v2184 = vrcp.pop %v2172
        %v2185 = vrcp.pop %v2175
        %v2186 = vrcp.pop %v2178
        %v2187 = vmul.f32 %v2140, %v2179
        %v2188 = vmul.f32 %v2142, %v2180
        %v2189 = vmul.f32 %v2144, %v2181
        %v2190 = vmul.f32 %v2146, %v2182
        %v2191 = vmul.f32 %v2148, %v2183
        %v2192 = vmul.f32 %v2150, %v2184
        %v2193 = vmul.f32 %v2152, %v2185
        %v2194 = vmul.f32 %v2154, %v2186
        %v2195 = vpack.c.bf16 %v2187, %v2187
        %v2196 = vpack.c.bf16 %v2188, %v2188
        %v2197 = vpack.c.bf16 %v2189, %v2189
        %v2198 = vpack.c.bf16 %v2190, %v2190
        %v2199 = vpack.c.bf16 %v2191, %v2191
        %v2200 = vpack.c.bf16 %v2192, %v2192
        %v2201 = vpack.c.bf16 %v2193, %v2193
        %v2202 = vpack.c.bf16 %v2194, %v2194
        %v2203 = vpack.c.bf16 %v1823, %v1823
        %v2204 = vpack.c.bf16 %v1839, %v1839
        %v2205 = vpack.c.bf16 %v1855, %v1855
        %v2206 = vpack.c.bf16 %v1871, %v1871
        %v2207 = vpack.c.bf16 %v1887, %v1887
        %v2208 = vpack.c.bf16 %v1903, %v1903
        %v2209 = vpack.c.bf16 %v1919, %v1919
        %v2210 = vpack.c.bf16 %v1935, %v1935
        %v2212 = vsel %vm2106, %v2195, 0
        %vm2214 = vcmask 1043456
        %v2216 = vsel %vm2214, %v2203, 0
        %2218 = vmatpush.bf16.msra.mxu0 0
        %2219 = vmatpush.bf16.msra.mxu0 0
        %2220 = vmatpush.bf16.msra.mxu0 0
        %2221 = vmatpush.bf16.msra.mxu0 0
        %2222 = vmatpush.bf16.msra.mxu0 0
        %2223 = vmatpush.bf16.msra.mxu0 0
        %2224 = vmatpush.bf16.msra.mxu0 0
        %2225 = vmatpush.bf16.msra.mxu0 %v2216
        %2226 = vmatmul.bf16.gmra.mxu0 %v2212
        %v2227 = vpop.f32.mrf.mxu0
        %v2228 = vadd.f32 0.0, %v2227
        %v2229 = vpop.f32.mrf.mxu0
        %2230 = vdwg.mxu0
        %v2232 = vsel %vm2106, %v2196, 0
        %v2235 = vsel %vm2214, %v2204, 0
        %2237 = vmatpush.bf16.msra.mxu0 0
        %2238 = vmatpush.bf16.msra.mxu0 0
        %2239 = vmatpush.bf16.msra.mxu0 0
        %2240 = vmatpush.bf16.msra.mxu0 0
        %2241 = vmatpush.bf16.msra.mxu0 0
        %2242 = vmatpush.bf16.msra.mxu0 0
        %2243 = vmatpush.bf16.msra.mxu0 0
        %2244 = vmatpush.bf16.msra.mxu0 %v2235
        %2245 = vmatmul.bf16.gmra.mxu0 %v2232
        %v2246 = vpop.f32.mrf.mxu0
        %v2247 = vadd.f32 0.0, %v2246
        %v2248 = vpop.f32.mrf.mxu0
        %2249 = vdwg.mxu0
        %v2251 = vsel %vm2106, %v2197, 0
        %v2254 = vsel %vm2214, %v2205, 0
        %2256 = vmatpush.bf16.msra.mxu0 0
        %2257 = vmatpush.bf16.msra.mxu0 0
        %2258 = vmatpush.bf16.msra.mxu0 0
        %2259 = vmatpush.bf16.msra.mxu0 0
        %2260 = vmatpush.bf16.msra.mxu0 0
        %2261 = vmatpush.bf16.msra.mxu0 0
        %2262 = vmatpush.bf16.msra.mxu0 0
        %2263 = vmatpush.bf16.msra.mxu0 %v2254
        %2264 = vmatmul.bf16.gmra.mxu0 %v2251
        %v2265 = vpop.f32.mrf.mxu0
        %v2266 = vadd.f32 0.0, %v2265
        %v2267 = vpop.f32.mrf.mxu0
        %2268 = vdwg.mxu0
        %v2270 = vsel %vm2106, %v2198, 0
        %v2273 = vsel %vm2214, %v2206, 0
        %2275 = vmatpush.bf16.msra.mxu0 0
        %2276 = vmatpush.bf16.msra.mxu0 0
        %2277 = vmatpush.bf16.msra.mxu0 0
        %2278 = vmatpush.bf16.msra.mxu0 0
        %2279 = vmatpush.bf16.msra.mxu0 0
        %2280 = vmatpush.bf16.msra.mxu0 0
        %2281 = vmatpush.bf16.msra.mxu0 0
        %2282 = vmatpush.bf16.msra.mxu0 %v2273
        %2283 = vmatmul.bf16.gmra.mxu0 %v2270
        %v2284 = vpop.f32.mrf.mxu0
        %v2285 = vadd.f32 0.0, %v2284
        %v2286 = vpop.f32.mrf.mxu0
        %2287 = vdwg.mxu0
        %v2289 = vsel %vm2106, %v2199, 0
        %v2292 = vsel %vm2214, %v2207, 0
        %2294 = vmatpush.bf16.msra.mxu0 0
        %2295 = vmatpush.bf16.msra.mxu0 0
        %2296 = vmatpush.bf16.msra.mxu0 0
        %2297 = vmatpush.bf16.msra.mxu0 0
        %2298 = vmatpush.bf16.msra.mxu0 0
        %2299 = vmatpush.bf16.msra.mxu0 0
        %2300 = vmatpush.bf16.msra.mxu0 0
        %2301 = vmatpush.bf16.msra.mxu0 %v2292
        %2302 = vmatmul.bf16.gmra.mxu0 %v2289
        %v2303 = vpop.f32.mrf.mxu0
        %v2304 = vadd.f32 0.0, %v2303
        %v2305 = vpop.f32.mrf.mxu0
        %2306 = vdwg.mxu0
        %v2308 = vsel %vm2106, %v2200, 0
        %v2311 = vsel %vm2214, %v2208, 0
        %2313 = vmatpush.bf16.msra.mxu0 0
        %2314 = vmatpush.bf16.msra.mxu0 0
        %2315 = vmatpush.bf16.msra.mxu0 0
        %2316 = vmatpush.bf16.msra.mxu0 0
        %2317 = vmatpush.bf16.msra.mxu0 0
        %2318 = vmatpush.bf16.msra.mxu0 0
        %2319 = vmatpush.bf16.msra.mxu0 0
        %2320 = vmatpush.bf16.msra.mxu0 %v2311
        %2321 = vmatmul.bf16.gmra.mxu0 %v2308
        %v2322 = vpop.f32.mrf.mxu0
        %v2323 = vadd.f32 0.0, %v2322
        %v2324 = vpop.f32.mrf.mxu0
        %2325 = vdwg.mxu0
        %v2327 = vsel %vm2106, %v2201, 0
        %v2330 = vsel %vm2214, %v2209, 0
        %2332 = vmatpush.bf16.msra.mxu0 0
        %2333 = vmatpush.bf16.msra.mxu0 0
        %2334 = vmatpush.bf16.msra.mxu0 0
        %2335 = vmatpush.bf16.msra.mxu0 0
        %2336 = vmatpush.bf16.msra.mxu0 0
        %2337 = vmatpush.bf16.msra.mxu0 0
        %2338 = vmatpush.bf16.msra.mxu0 0
        %2339 = vmatpush.bf16.msra.mxu0 %v2330
        %2340 = vmatmul.bf16.gmra.mxu0 %v2327
        %v2341 = vpop.f32.mrf.mxu0
        %v2342 = vadd.f32 0.0, %v2341
        %v2343 = vpop.f32.mrf.mxu0
        %2344 = vdwg.mxu0
        %v2346 = vsel %vm2106, %v2202, 0
        %v2349 = vsel %vm2214, %v2210, 0
        %2351 = vmatpush.bf16.msra.mxu0 0
        %2352 = vmatpush.bf16.msra.mxu0 0
        %2353 = vmatpush.bf16.msra.mxu0 0
        %2354 = vmatpush.bf16.msra.mxu0 0
        %2355 = vmatpush.bf16.msra.mxu0 0
        %2356 = vmatpush.bf16.msra.mxu0 0
        %2357 = vmatpush.bf16.msra.mxu0 0
        %2358 = vmatpush.bf16.msra.mxu0 %v2349
        %2359 = vmatmul.bf16.gmra.mxu0 %v2346
        %v2360 = vpop.f32.mrf.mxu0
        %v2361 = vadd.f32 0.0, %v2360
        %v2362 = vpop.f32.mrf.mxu0
        %2363 = vdwg.mxu0
        %v2364 = vpack.c.bf16 %v2228, %v2228
        %v2365 = vpack.c.bf16 %v2247, %v2247
        %v2366 = vpack.c.bf16 %v2266, %v2266
        %v2367 = vpack.c.bf16 %v2285, %v2285
        %v2368 = vpack.c.bf16 %v2304, %v2304
        %v2369 = vpack.c.bf16 %v2323, %v2323
        %v2370 = vpack.c.bf16 %v2342, %v2342
        %v2371 = vpack.c.bf16 %v2361, %v2361
        %v2373 = vsel %vm868, %v2364, 0
        %v2376 = vsel %vm1356, %v381, 0
        %2378 = vmatpush.bf16.msra.mxu0 0
        %2379 = vmatpush.bf16.msra.mxu0 0
        %2380 = vmatpush.bf16.msra.mxu0 0
        %2381 = vmatpush.bf16.msra.mxu0 0
        %2382 = vmatpush.bf16.msra.mxu0 0
        %2383 = vmatpush.bf16.msra.mxu0 0
        %2384 = vmatpush.bf16.msra.mxu0 0
        %2385 = vmatpush.bf16.msra.mxu0 %v2376
        %2386 = vmatmul.bf16.gmra.mxu0 %v2373
        %v2387 = vpop.f32.mrf.mxu0
        %v2388 = vadd.f32 0.0, %v2387
        %v2389 = vpop.f32.mrf.mxu0
        %2390 = vdwg.mxu0
        %v2392 = vsel %vm868, %v2365, 0
        %v2395 = vsel %vm1356, %v382, 0
        %2397 = vmatpush.bf16.msra.mxu0 0
        %2398 = vmatpush.bf16.msra.mxu0 0
        %2399 = vmatpush.bf16.msra.mxu0 0
        %2400 = vmatpush.bf16.msra.mxu0 0
        %2401 = vmatpush.bf16.msra.mxu0 0
        %2402 = vmatpush.bf16.msra.mxu0 0
        %2403 = vmatpush.bf16.msra.mxu0 0
        %2404 = vmatpush.bf16.msra.mxu0 %v2395
        %2405 = vmatmul.bf16.gmra.mxu0 %v2392
        %v2406 = vpop.f32.mrf.mxu0
        %v2407 = vadd.f32 0.0, %v2406
        %v2408 = vpop.f32.mrf.mxu0
        %2409 = vdwg.mxu0
        %v2411 = vsel %vm868, %v2366, 0
        %v2414 = vsel %vm1356, %v383, 0
        %2416 = vmatpush.bf16.msra.mxu0 0
        %2417 = vmatpush.bf16.msra.mxu0 0
        %2418 = vmatpush.bf16.msra.mxu0 0
        %2419 = vmatpush.bf16.msra.mxu0 0
        %2420 = vmatpush.bf16.msra.mxu0 0
        %2421 = vmatpush.bf16.msra.mxu0 0
        %2422 = vmatpush.bf16.msra.mxu0 0
        %2423 = vmatpush.bf16.msra.mxu0 %v2414
        %2424 = vmatmul.bf16.gmra.mxu0 %v2411
        %v2425 = vpop.f32.mrf.mxu0
        %v2426 = vadd.f32 0.0, %v2425
        %v2427 = vpop.f32.mrf.mxu0
        %2428 = vdwg.mxu0
        %v2430 = vsel %vm868, %v2367, 0
        %v2433 = vsel %vm1356, %v384, 0
        %2435 = vmatpush.bf16.msra.mxu0 0
        %2436 = vmatpush.bf16.msra.mxu0 0
        %2437 = vmatpush.bf16.msra.mxu0 0
        %2438 = vmatpush.bf16.msra.mxu0 0
        %2439 = vmatpush.bf16.msra.mxu0 0
        %2440 = vmatpush.bf16.msra.mxu0 0
        %2441 = vmatpush.bf16.msra.mxu0 0
        %2442 = vmatpush.bf16.msra.mxu0 %v2433
        %2443 = vmatmul.bf16.gmra.mxu0 %v2430
        %v2444 = vpop.f32.mrf.mxu0
        %v2445 = vadd.f32 0.0, %v2444
        %v2446 = vpop.f32.mrf.mxu0
        %2447 = vdwg.mxu0
        %v2449 = vsel %vm868, %v2368, 0
        %v2452 = vsel %vm1356, %v385, 0
        %2454 = vmatpush.bf16.msra.mxu0 0
        %2455 = vmatpush.bf16.msra.mxu0 0
        %2456 = vmatpush.bf16.msra.mxu0 0
        %2457 = vmatpush.bf16.msra.mxu0 0
        %2458 = vmatpush.bf16.msra.mxu0 0
        %2459 = vmatpush.bf16.msra.mxu0 0
        %2460 = vmatpush.bf16.msra.mxu0 0
        %2461 = vmatpush.bf16.msra.mxu0 %v2452
        %2462 = vmatmul.bf16.gmra.mxu0 %v2449
        %v2463 = vpop.f32.mrf.mxu0
        %v2464 = vadd.f32 0.0, %v2463
        %v2465 = vpop.f32.mrf.mxu0
        %2466 = vdwg.mxu0
        %v2468 = vsel %vm868, %v2369, 0
        %v2471 = vsel %vm1356, %v386, 0
        %2473 = vmatpush.bf16.msra.mxu0 0
        %2474 = vmatpush.bf16.msra.mxu0 0
        %2475 = vmatpush.bf16.msra.mxu0 0
        %2476 = vmatpush.bf16.msra.mxu0 0
        %2477 = vmatpush.bf16.msra.mxu0 0
        %2478 = vmatpush.bf16.msra.mxu0 0
        %2479 = vmatpush.bf16.msra.mxu0 0
        %2480 = vmatpush.bf16.msra.mxu0 %v2471
        %2481 = vmatmul.bf16.gmra.mxu0 %v2468
        %v2482 = vpop.f32.mrf.mxu0
        %v2483 = vadd.f32 0.0, %v2482
        %v2484 = vpop.f32.mrf.mxu0
        %2485 = vdwg.mxu0
        %v2487 = vsel %vm868, %v2370, 0
        %v2490 = vsel %vm1356, %v387, 0
        %2492 = vmatpush.bf16.msra.mxu0 0
        %2493 = vmatpush.bf16.msra.mxu0 0
        %2494 = vmatpush.bf16.msra.mxu0 0
        %2495 = vmatpush.bf16.msra.mxu0 0
        %2496 = vmatpush.bf16.msra.mxu0 0
        %2497 = vmatpush.bf16.msra.mxu0 0
        %2498 = vmatpush.bf16.msra.mxu0 0
        %2499 = vmatpush.bf16.msra.mxu0 %v2490
        %2500 = vmatmul.bf16.gmra.mxu0 %v2487
        %v2501 = vpop.f32.mrf.mxu0
        %v2502 = vadd.f32 0.0, %v2501
        %v2503 = vpop.f32.mrf.mxu0
        %2504 = vdwg.mxu0
        %v2506 = vsel %vm868, %v2371, 0
        %v2509 = vsel %vm1356, %v388, 0
        %2511 = vmatpush.bf16.msra.mxu0 0
        %2512 = vmatpush.bf16.msra.mxu0 0
        %2513 = vmatpush.bf16.msra.mxu0 0
        %2514 = vmatpush.bf16.msra.mxu0 0
        %2515 = vmatpush.bf16.msra.mxu0 0
        %2516 = vmatpush.bf16.msra.mxu0 0
        %2517 = vmatpush.bf16.msra.mxu0 0
        %2518 = vmatpush.bf16.msra.mxu0 %v2509
        %2519 = vmatmul.bf16.gmra.mxu0 %v2506
        %v2520 = vpop.f32.mrf.mxu0
        %v2521 = vadd.f32 0.0, %v2520
        %v2522 = vpop.f32.mrf.mxu0
        %2523 = vdwg.mxu0
        %v2524 = vsel %vm391, %v2388, 0.0
        %v2525 = vsel %vm391, %v2407, 0.0
        %v2526 = vadd.f32 %v2524, %v2525
        %v2527 = vsel %vm391, %v2426, 0.0
        %v2528 = vadd.f32 %v2526, %v2527
        %v2529 = vsel %vm391, %v2445, 0.0
        %v2530 = vadd.f32 %v2528, %v2529
        %v2531 = vsel %vm391, %v2464, 0.0
        %v2532 = vadd.f32 %v2530, %v2531
        %v2533 = vsel %vm391, %v2483, 0.0
        %v2534 = vadd.f32 %v2532, %v2533
        %v2535 = vsel %vm391, %v2502, 0.0
        %v2536 = vadd.f32 %v2534, %v2535
        %v2537 = vsel %vm391, %v2521, 0.0
        %v2538 = vadd.f32 %v2536, %v2537
        %v2539 = vperm.slane %v389, 7
        %v2540 = vadd.f32 %v2538, %v2539
        %v2541 = vadd.f32 %v1523, %v2540
        %v2542 = vsel %vm391, %v2541, 0.0
        %2543 = vadd.xlane.f32.xlu0 %v2542
        %v2544 = vpop.xlane.xlu0 %2543
        %v2545 = vmul.f32 %v2544, %v401
        %v2546 = vsub.f32 %v2541, %v2545
        %v2547 = vmul.f32 %v2546, %v2546
        %v2548 = vsel %vm391, %v2547, 0.0
        %2549 = vadd.xlane.f32.xlu0 %v2548
        %v2550 = vpop.xlane.xlu0 %2549
        %v2551 = vmul.f32 %v2550, %v401
        %v2552 = vadd.f32 %v2551, 1e-05
        %v2553 = vrsqrt.pop %v2552
        %v2554 = vmul.f32 %v2553, %v2552
        %v2555 = vmul.f32 %v2554, %v2553
        %v2556 = vmul.f32 0.5, %v2555
        %v2557 = vsub.f32 1.5, %v2556
        %v2558 = vmul.f32 %v2553, %v2557
        %vm2559 = vweird.f32 %v2552
        %vm2560 = vweird.f32 %v2553
        %vm2561 = vmor %vm2559, %vm2560
        %v2562 = vsel %vm2561, %v2553, %v2558
        %v2563 = vmul.f32 %v2546, %v2562
        %v2564 = vperm.slane %v389, 4
        %v2565 = vmul.f32 %v2563, %v2564
        %v2566 = vperm.slane %v389, 5
        %v2567 = vadd.f32 %v2565, %v2566
        %v2568 = vpack.c.bf16 %v2567, %v2567
        %v2569 = vld [vmem:[%s4] sm:$0xf]
        %v2570 = vld [vmem:[%s4 + $0x4] sm:$0xf]
        %v2571 = vld [vmem:[%s4 + $0x8] sm:$0xf]
        %v2572 = vld [vmem:[%s4 + $0xc] sm:$0xf]
        %v2573 = vld [vmem:[%s6] sm:$0x1]
        %v2575 = vperm.slane %v2573, 0
        %v2581 = vunpack.c.l.b16 %v2569
        %v2582 = vunpack.c.l.b16 %v2570
        %v2583 = vunpack.c.l.b16 %v2571
        %v2584 = vunpack.c.l.b16 %v2572
        %v2585 = vpack.c.b16 %v2582, %v2581
        %v2586 = vpack.c.b16 %v2584, %v2583
        %v2590 = vsel %vm391, %v2568, 0
        %2592 = vmatpush.bf16.msra.mxu0 0
        %2593 = vmatpush.bf16.msra.mxu0 0
        %2594 = vmatpush.bf16.msra.mxu0 0
        %2595 = vmatpush.bf16.msra.mxu0 0
        %2596 = vmatpush.bf16.msra.mxu0 0
        %2597 = vmatpush.bf16.msra.mxu0 0
        %2598 = vmatpush.bf16.msra.mxu0 %v2586
        %2599 = vmatpush.bf16.msra.mxu0 %v2585
        %2600 = vmatmul.bf16.gmra.mxu0 %v2590
        %v2601 = vpop.f32.mrf.mxu0
        %v2602 = vadd.f32 %v2575, %v2601
        %v2603 = vpop.f32.mrf.mxu0
        %2604 = vdwg.mxu0
        %v2605 = vmul.f32 %v2602, 0.5
        %v2606 = vmul.f32 %v2602, 0.044715
        %v2607 = vmul.f32 %v2606, %v2602
        %v2608 = vmul.f32 %v2607, %v2602
        %v2609 = vadd.f32 %v2602, %v2608
        %v2610 = vmul.f32 %v2609, 0.7978846
        %v2611 = vtanh.pop %v2610
        %v2612 = vadd.f32 %v2611, 1.0
        %v2613 = vmul.f32 %v2605, %v2612
        %v2614 = vpack.c.bf16 %v2613, %v2613
        %v2615 = vld [vmem:[%s5] sm:$0xf]
        %v2616 = vld [vmem:[%s5 + $0x4] sm:$0xf]
        %v2617 = vld [vmem:[%s5 + $0x8] sm:$0xf]
        %v2618 = vld [vmem:[%s5 + $0xc] sm:$0xf]
        %v2619 = vld [vmem:[%s5 + $0x10] sm:$0xf]
        %v2620 = vld [vmem:[%s5 + $0x14] sm:$0xf]
        %v2621 = vld [vmem:[%s5 + $0x18] sm:$0xf]
        %v2622 = vld [vmem:[%s5 + $0x1c] sm:$0xf]
        %v2623 = vld [vmem:[%s5 + $0x20] sm:$0xf]
        %v2624 = vld [vmem:[%s5 + $0x24] sm:$0xf]
        %v2625 = vld [vmem:[%s5 + $0x28] sm:$0xf]
        %v2626 = vld [vmem:[%s5 + $0x2c] sm:$0xf]
        %v2627 = vld [vmem:[%s5 + $0x30] sm:$0xf]
        %v2628 = vld [vmem:[%s5 + $0x34] sm:$0xf]
        %v2629 = vld [vmem:[%s5 + $0x38] sm:$0xf]
        %v2630 = vld [vmem:[%s5 + $0x3c] sm:$0xf]
        %v2631 = vperm.slane %v390, 0
        %v2648 = vunpack.c.l.b16 %v2615
        %v2649 = vunpack.c.l.b16 %v2616
        %v2650 = vunpack.c.l.b16 %v2617
        %v2651 = vunpack.c.l.b16 %v2618
        %v2652 = vunpack.c.l.b16 %v2619
        %v2653 = vunpack.c.l.b16 %v2620
        %v2654 = vunpack.c.l.b16 %v2621
        %v2655 = vunpack.c.l.b16 %v2622
        %v2656 = vunpack.c.l.b16 %v2623
        %v2657 = vunpack.c.l.b16 %v2624
        %v2658 = vunpack.c.l.b16 %v2625
        %v2659 = vunpack.c.l.b16 %v2626
        %v2660 = vunpack.c.l.b16 %v2627
        %v2661 = vunpack.c.l.b16 %v2628
        %v2662 = vunpack.c.l.b16 %v2629
        %v2663 = vunpack.c.l.b16 %v2630
        %v2664 = vpack.c.b16 %v2649, %v2648
        %v2665 = vpack.c.b16 %v2651, %v2650
        %v2666 = vpack.c.b16 %v2653, %v2652
        %v2667 = vpack.c.b16 %v2655, %v2654
        %v2668 = vpack.c.b16 %v2657, %v2656
        %v2669 = vpack.c.b16 %v2659, %v2658
        %v2670 = vpack.c.b16 %v2661, %v2660
        %v2671 = vpack.c.b16 %v2663, %v2662
        %2680 = vmatpush.bf16.msra.mxu0 %v2671
        %2681 = vmatpush.bf16.msra.mxu0 %v2670
        %2682 = vmatpush.bf16.msra.mxu0 %v2669
        %2683 = vmatpush.bf16.msra.mxu0 %v2668
        %2684 = vmatpush.bf16.msra.mxu0 %v2667
        %2685 = vmatpush.bf16.msra.mxu0 %v2666
        %2686 = vmatpush.bf16.msra.mxu0 %v2665
        %2687 = vmatpush.bf16.msra.mxu0 %v2664
        %2688 = vmatmul.bf16.gmra.mxu0 %v2614
        %v2689 = vpop.f32.mrf.mxu0
        %v2690 = vadd.f32 %v2631, %v2689
        %v2691 = vpop.f32.mrf.mxu0
        %2692 = vdwg.mxu0
        %v2693 = vadd.f32 %v2541, %v2690
        %2694 = vst.msk [vmem:[%s311] sm:$0xff] %vm391, %v2693
        %s2695 = sand.u32 %s208, 1
        %s2696 = scalar_lea.sflag [#allocation3], %s2695
        %s2697 = sand.u32 %s208, 1
        %s2698 = smul.addr %s2697, 8
        %s2699 = scalar_lea.vmem [#allocation2], %s2698
        // Predicated region
        $region53: #{tpu_custom_call.1} parent=51 // pred_check
          %p2700 = pneg %p218
        $region54: #{tpu_custom_call.1} parent=51 // pred_check_branch
          %2702 = sbr.rel (%p2700) target = $region56
        $region55: #{tpu_custom_call.1} parent=51 // pred_region
          %2704 = vsyncadd %s2696, 0
          %s2705 = smul.addr %s22, 8
          %s2706 = scalar_lea.hbm %s8, %s2705
          %s2708 = sshll.u32 %s2699, 4
          %s2709 = int_to_ptr.vmem [resolvable:$true] %s2708
          %s2710 = sshll.u32 %s2706, 4
          %s2711 = int_to_ptr.hbm [resolvable:$true] %s2710
          %2713 = dma.vmem_to_hbm [thread:$0]  %s2709, 128, %s2711, %s2696
        $region56: #{tpu_custom_call.1} parent=51 // pred_fallthru
          _
      $region52: #{tpu_custom_call.1} parent=5 // pred_fallthru
        _
      %p2714 = scmp.le.s32.totalorder 2, %s17
      // Predicated region
      $region57: #{tpu_custom_call.1} parent=5 // pred_check
        %p2715 = pneg %p2714
      $region58: #{tpu_custom_call.1} parent=5 // pred_check_branch
        %2717 = sbr.rel (%p2715) target = $region60
      $region59: #{tpu_custom_call.1} parent=5 // pred_region
        %s2718 = ssub.s32 %s17, 2
        // Predicated region
        $region61: #{tpu_custom_call.1} parent=59 // pred_check
          %p2719 = pneg %p224
        $region62: #{tpu_custom_call.1} parent=59 // pred_check_branch
          %2721 = sbr.rel (%p2719) target = $region64
        $region63: #{tpu_custom_call.1} parent=59 // pred_region
          %s2722 = sand.u32 %s209, 1
          %s2723 = scalar_lea.sflag [#allocation3], %s2722
          %s2724 = sand.u32 %s209, 1
          %s2725 = smul.addr %s2724, 8
          %s2726 = scalar_lea.vmem [#allocation2], %s2725
          %2728 = dma.done %s2723, 128
        $region64: #{tpu_custom_call.1} parent=59 // pred_fallthru
          _
      $region60: #{tpu_custom_call.1} parent=5 // pred_fallthru
        _
    $region6: #{tpu_custom_call.1} parent=1 // loop_footer
      %s21 = sadd.s32 1, %s17
    $region7: #{tpu_custom_call.1} parent=1 // loop_footer_branch
      %16 = sbr.rel target = $region3
    $region8: #{tpu_custom_call.1} parent=1 // loop_exit
      _
    %2729 = vsyncpa [#allocation3], 1
    %s2730 = scalar_lea.sflag [#allocation3], 1
    %2731 = vsyncpa %s2730, 1

</llo_original>
